<compile_context>
chip_gen: v7x
topology: tpu7x:2x2x1
jax: 0.10.0
libtpu: 0.0.40
codegen_flags: <defaults>
</compile_context>

<pallas_src>
import functools

import jax
import jax.numpy as jnp
from jax import lax
from jax.experimental import pallas as pl
from jax.experimental.pallas import tpu as pltpu

PATCH = 4          # patch size of the surrogate patch-embed "conv"
EMBED = 128        # token embedding dim (MXU-aligned)
HIDDEN = 128       # MLP hidden dim (MXU-aligned)
PDIM_PAD = 128     # padded patch dim (C * PATCH * PATCH must be <= 128)
CORE_LANES = 128   # per-core stats laid out on 128 lanes (requires B <= 128)
MAX_TILE_GROUPS = 8  # token-tile cap = 8 * 128 = 1024 lanes (well inside VMEM)


def _round_up(x, m):
    return -(-x // m) * m


@functools.lru_cache(maxsize=None)
def _elementwise_dtype():
    """bf16 elementwise on generations with a bf16 VPU/EUP (v6e/v7x); f32 else."""
    try:
        kind = jax.devices()[0].device_kind.lower()
    except Exception:
        return jnp.float32
    return jnp.bfloat16 if ("v6" in kind or "v7" in kind) else jnp.float32


# ----------------------------------------------------------------------------
# Fused kernel: patch-embed + MLP block + head + masked BCE / per-core stats
# ----------------------------------------------------------------------------
def _fused_forward_call(*, n_pad, tm, s_per_core, compute_dtype):
    n_tiles = n_pad // tm
    cdt = compute_dtype

    def kernel(xT_ref, m_ref, lblrow_ref,
               wpT_ref, bp_ref, w1T_ref, b1_ref, w2T_ref, b2_ref,
               whT_ref, bh_ref,
               logit_ref, prob_ref, stats_ref):
        # ---- encoder surrogate (transposed: features on sublanes, tokens on
        #      lanes; bf16 MXU operands; elementwise chain in `cdt`).
        x = xT_ref[...]                                              # (128, TM) bf16
        h = (jnp.dot(wpT_ref[...], x, preferred_element_type=cdt)
             + bp_ref[...].astype(cdt))                              # (128, TM)
        # TODO(synk): torch nn.GELU default is exact erf; surrogate uses the
        # tanh approximation (EUP-friendly, tiny numeric difference).
        hh = jax.nn.gelu(
            jnp.dot(w1T_ref[...], h.astype(jnp.bfloat16),
                    preferred_element_type=cdt) + b1_ref[...].astype(cdt),
            approximate=True)
        h = (h
             + jnp.dot(w2T_ref[...], hh.astype(jnp.bfloat16),
                       preferred_element_type=cdt)
             + b2_ref[...].astype(cdt))
        # 1-wide head on the MXU (vmatmul slot has slack; keeps VALU free).
        lg = jnp.dot(whT_ref[...], h.astype(jnp.bfloat16),
                     preferred_element_type=jnp.float32) + bh_ref[...]  # (1,TM) f32

        # ---- fused aggregation: sigmoid / BCE / per-core partial sums,
        #      no HBM round trip of the logits.
        m = m_ref[...]                                               # (1, TM) f32
        lb = lblrow_ref[...]                                         # (1, TM) f32
        p = jax.nn.sigmoid(lg)
        logit_ref[...] = lg                                          # lane-dense
        prob_ref[...] = p                                            # lane-dense

        # Numerically stable binary_cross_entropy_with_logits.  (log(1+e^-|x|)
        # instead of log1p: absolute error is bounded by ~1e-7, negligible for
        # the masked mean; keeps the proven lowering path.)
        bce = (jnp.maximum(lg, 0.0) - lg * lb
               + jnp.log(1.0 + jnp.exp(-jnp.abs(lg))))

        # Per-tile, per-core partial sums (padded tokens contribute 0 via m==0):
        #   row 0: sum(sigmoid * m), row 1: sum(label * m),
        #   row 2: sum(m),           row 3: sum(bce * m)
        rows = jnp.concatenate([p * m, lb * m, m, bce * m], axis=0)  # (4, TM) f32
        start = pl.program_id(0) * tm
        tok_col = start + lax.broadcasted_iota(jnp.int32, (tm, CORE_LANES), 0)
        core_lo = lax.broadcasted_iota(jnp.int32, (tm, CORE_LANES), 1) * s_per_core
        # token->core one-hot: 0/1 is exact in bf16 -> single bf16 MXU pass.
        ohT = ((tok_col >= core_lo) & (tok_col < core_lo + s_per_core)
               ).astype(jnp.bfloat16)                                # (TM, 128)
        stats_ref[...] = jnp.dot(rows.astype(jnp.bfloat16), ohT,
                                 preferred_element_type=jnp.float32)  # (4, 128)

    in_specs = [
        pl.BlockSpec((PDIM_PAD, tm), lambda t: (0, t)),      # xT (tokens on lanes)
        pl.BlockSpec((1, tm), lambda t: (0, t)),             # mask row
        pl.BlockSpec((1, tm), lambda t: (0, t)),             # per-token label row
        pl.BlockSpec((EMBED, PDIM_PAD), lambda t: (0, 0)),   # wpT
        pl.BlockSpec((EMBED, 1), lambda t: (0, 0)),          # bp
        pl.BlockSpec((HIDDEN, EMBED), lambda t: (0, 0)),     # w1T
        pl.BlockSpec((HIDDEN, 1), lambda t: (0, 0)),         # b1
        pl.BlockSpec((EMBED, HIDDEN), lambda t: (0, 0)),     # w2T
        pl.BlockSpec((EMBED, 1), lambda t: (0, 0)),          # b2
        pl.BlockSpec((1, EMBED), lambda t: (0, 0)),          # w_head (row)
        pl.BlockSpec((1, 1), lambda t: (0, 0)),              # b_head
    ]
    out_shape = (
        jax.ShapeDtypeStruct((1, n_pad), jnp.float32),                    # logits row
        jax.ShapeDtypeStruct((1, n_pad), jnp.float32),                    # sigmoid row
        jax.ShapeDtypeStruct((4, n_tiles * CORE_LANES), jnp.float32),     # per-tile stats
    )
    out_specs = (
        pl.BlockSpec((1, tm), lambda t: (0, t)),
        pl.BlockSpec((1, tm), lambda t: (0, t)),
        pl.BlockSpec((4, CORE_LANES), lambda t: (0, t)),
    )
    return pl.pallas_call(
        kernel,
        out_shape=out_shape,
        grid=(n_tiles,),
        in_specs=in_specs,
        out_specs=out_specs,
        # Every tile writes disjoint output blocks -> token axis is parallel
        # (megacore-shardable on v7x); partial stats are finished with a tiny
        # XLA sum in the wrapper.
        compiler_params=pltpu.CompilerParams(
            dimension_semantics=("parallel",),
            vmem_limit_bytes=32 * 1024 * 1024),
    )


# ----------------------------------------------------------------------------
# Parameter init (deterministic, synthetic; stored in kernel orientation)
# ----------------------------------------------------------------------------
def init_params(in_channels=3):
    keys = jax.random.split(jax.random.PRNGKey(42), 4)
    pdim = in_channels * PATCH * PATCH
    assert pdim <= PDIM_PAD
    s = 0.05
    wpT = jnp.zeros((EMBED, PDIM_PAD), jnp.float32).at[:, :pdim].set(
        s * jax.random.normal(keys[0], (EMBED, pdim), jnp.float32))
    return {
        "wpT": wpT.astype(jnp.bfloat16),
        "bp": jnp.zeros((EMBED, 1), jnp.float32),
        "w1T": (s * jax.random.normal(keys[1], (HIDDEN, EMBED), jnp.float32)
                ).astype(jnp.bfloat16),
        "b1": jnp.zeros((HIDDEN, 1), jnp.float32),
        "w2T": (s * jax.random.normal(keys[2], (EMBED, HIDDEN), jnp.float32)
                ).astype(jnp.bfloat16),
        "b2": jnp.zeros((EMBED, 1), jnp.float32),
        "whT": (s * jax.random.normal(keys[3], (1, EMBED), jnp.float32)
                ).astype(jnp.bfloat16),
        "bh": jnp.zeros((1, 1), jnp.float32),
    }


# ----------------------------------------------------------------------------
# Forward pass (mirrors MedSAMCancerDetectorV2.forward)
# ----------------------------------------------------------------------------
@functools.partial(jax.jit, static_argnames=("has_prostate",))
def medsam_cancer_detector_v2_forward(params, image, needle_mask, label,
                                      prostate_mask=None, has_prostate=True):
    B, C, Hi, Wi = image.shape
    p = PATCH
    nH, nW = Hi // p, Wi // p
    H, W = nH, nW
    S = H * W                      # tokens per core
    N = B * S
    pdim = C * p * p
    assert pdim <= PDIM_PAD and B <= CORE_LANES

    # Token-tile sizing: big tiles amortize the ~0.35 us/step grid overhead and
    # enlarge DMA bursts; but keep >=2 tiles whenever possible so both v7x
    # TensorCores get work under dimension_semantics=("parallel",).
    n128 = _round_up(N, 128) // 128
    tm_groups = min(MAX_TILE_GROUPS, n128)
    if n128 > 1 and tm_groups == n128:
        tm_groups = (n128 + 1) // 2
    TM = tm_groups * 128
    N_pad = _round_up(N, TM)
    n_tiles = N_pad // TM

    # --- unfold NCHW image directly into the transposed (features x tokens)
    #     bf16 slab the kernel consumes: no intermediate (N_pad, 128) f32
    #     materialization + separate transpose. ---
    x_feat = (image.reshape(B, C, nH, p, nW, p)
                   .transpose(1, 3, 5, 0, 2, 4)      # (C, p, p, B, nH, nW)
                   .reshape(pdim, N))                # feature-major, token on lanes
    xT = (jnp.zeros((PDIM_PAD, N_pad), jnp.bfloat16)
             .at[:pdim, :N].set(x_feat.astype(jnp.bfloat16)))        # (128, N_pad)

    # --- pool needle / prostate masks to the logits-map grid (glue) ---
    def pool(mk):
        b, c, hh, ww = mk.shape
        return mk.reshape(b, c, H, hh // H, W, ww // W).mean(axis=(3, 5))

    needle_pooled = pool(needle_mask) > 0.5                          # (B,1,H,W)
    mask = needle_pooled
    if has_prostate and prostate_mask is not None:
        prost_pooled = pool(prostate_mask) > 0.5
        combined = mask & prost_pooled
        # torch reference does a whole-batch (global) empty-mask fallback,
        # not a per-core one; replicate that.
        mask = jnp.where(jnp.sum(combined) > 0, combined, mask)

    mask_flat = mask.transpose(0, 2, 3, 1).reshape(N).astype(jnp.float32)
    m_row = jnp.zeros((1, N_pad), jnp.float32).at[0, :N].set(mask_flat)
    lbl_flat = jnp.repeat(label.astype(jnp.float32), S)              # (N,)
    lbl_row = jnp.zeros((1, N_pad), jnp.float32).at[0, :N].set(lbl_flat)

    logits_row, probs_row, stats = _fused_forward_call(
        n_pad=N_pad, tm=TM, s_per_core=S, compute_dtype=_elementwise_dtype())(
        xT, m_row, lbl_row,
        params["wpT"], params["bp"], params["w1T"], params["b1"],
        params["w2T"], params["b2"], params["whT"], params["bh"])

    # --- tiny XLA finish: sum per-tile partial stats and normalize ---
    stats = stats.reshape(4, n_tiles, CORE_LANES).sum(axis=1)        # (4, 128)
    pred_num = stats[0, :B]
    lbl_num = stats[1, :B]
    cnt = stats[2, :B]
    bce_num = stats[3, :B]
    total_cnt = jnp.maximum(jnp.sum(cnt), 1.0)     # guard: empty mask
    loss = jnp.sum(bce_num) / total_cnt
    safe_cnt = jnp.maximum(cnt, 1e-6)              # guard: core w/o masked patches
    core_pred = (pred_num / safe_cnt).reshape(B, 1)
    core_lbl = (lbl_num / safe_cnt).reshape(B, 1)

    logits_map = logits_row[0, :N].reshape(B, H, W)[:, None]         # NCHW (B,1,H,W)

    # TODO(synk): torch returns boolean-gathered (dynamic-shape) patch
    # predictions/labels; here they are padded to B*H*W with a validity mask.
    patch_pred = probs_row[0, :N].reshape(N, 1)
    patch_lbl = lbl_flat.reshape(N, 1)
    return {
        "loss": loss,
        "core_predictions": core_pred,
        "core_labels": core_lbl,
        "cancer_logits_map": logits_map,
        "patch_predictions": patch_pred,   # valid where patch_mask == 1
        "patch_labels": patch_lbl,         # valid where patch_mask == 1
        "patch_mask": mask_flat.reshape(N, 1),
    }


if __name__ == "__main__":
    key = jax.random.PRNGKey(0)
    B, C, Hi, Wi = 2, 3, 16, 16

    image = jax.random.normal(key, (B, C, Hi, Wi), jnp.float32)

    # deterministic needle / prostate masks at full image resolution
    needle_mask = jnp.zeros((B, 1, Hi, Wi), jnp.float32).at[:, :, 4:12, 4:12].set(1.0)
    prostate_mask = jnp.zeros((B, 1, Hi, Wi), jnp.float32).at[:, :, :, 0:8].set(1.0)
    label = jnp.array([0.0, 1.0], jnp.float32)

    params = init_params(in_channels=C)

    out = medsam_cancer_detector_v2_forward(
        params, image, needle_mask, label, prostate_mask, has_prostate=True)
    jax.block_until_ready(out)

    # light sanity checks on shapes / finiteness / value ranges
    assert out["cancer_logits_map"].shape == (B, 1, Hi // PATCH, Wi // PATCH)
    assert out["core_predictions"].shape == (B, 1)
    assert out["core_labels"].shape == (B, 1)
    assert out["patch_predictions"].shape == (B * (Hi // PATCH) * (Wi // PATCH), 1)
    assert bool(jnp.isfinite(out["loss"]))
    assert bool(jnp.all(out["core_predictions"] >= 0.0))
    assert bool(jnp.all(out["core_predictions"] <= 1.0))

    print("KERNEL_OK")
</pallas_src>

<mosaic_0001>
module attributes {stable_mosaic.version = 11 : i64} {
  func.func @kernel(%arg0: i32, %arg1: memref<128x128xbf16, #tpu.memory_space<vmem>>, %arg2: memref<1x128xf32, #tpu.memory_space<vmem>>, %arg3: memref<1x128xf32, #tpu.memory_space<vmem>>, %arg4: memref<128x128xbf16, #tpu.memory_space<vmem>>, %arg5: memref<128x1xf32, #tpu.memory_space<vmem>>, %arg6: memref<128x128xbf16, #tpu.memory_space<vmem>>, %arg7: memref<128x1xf32, #tpu.memory_space<vmem>>, %arg8: memref<128x128xbf16, #tpu.memory_space<vmem>>, %arg9: memref<128x1xf32, #tpu.memory_space<vmem>>, %arg10: memref<1x128xbf16, #tpu.memory_space<vmem>>, %arg11: memref<1x1xf32, #tpu.memory_space<vmem>>, %arg12: memref<1x128xf32, #tpu.memory_space<vmem>>, %arg13: memref<1x128xf32, #tpu.memory_space<vmem>>, %arg14: memref<4x128xf32, #tpu.memory_space<vmem>>) attributes {dimension_semantics = [#tpu.dimension_semantics<parallel>], iteration_bounds = array<i64: 1>, scalar_prefetch = 0 : i64, scratch_operands = 0 : i64, tpu.core_type = #tpu.core_type<tc>, window_params = [{transform_indices = @transform_0, window_bounds = array<i64: 128, 128>}, {transform_indices = @transform_1, window_bounds = array<i64: 1, 128>}, {transform_indices = @transform_2, window_bounds = array<i64: 1, 128>}, {pipeline_mode = #tpu.pipeline_mode<synchronous>, transform_indices = @transform_3, window_bounds = array<i64: 128, 128>}, {pipeline_mode = #tpu.pipeline_mode<synchronous>, transform_indices = @transform_4, window_bounds = array<i64: 128, 1>}, {pipeline_mode = #tpu.pipeline_mode<synchronous>, transform_indices = @transform_5, window_bounds = array<i64: 128, 128>}, {pipeline_mode = #tpu.pipeline_mode<synchronous>, transform_indices = @transform_6, window_bounds = array<i64: 128, 1>}, {pipeline_mode = #tpu.pipeline_mode<synchronous>, transform_indices = @transform_7, window_bounds = array<i64: 128, 128>}, {pipeline_mode = #tpu.pipeline_mode<synchronous>, transform_indices = @transform_8, window_bounds = array<i64: 128, 1>}, {pipeline_mode = #tpu.pipeline_mode<synchronous>, transform_indices = @transform_9, window_bounds = array<i64: 1, 128>}, {pipeline_mode = #tpu.pipeline_mode<synchronous>, transform_indices = @transform_10, window_bounds = array<i64: 1, 1>}, {transform_indices = @transform_11, window_bounds = array<i64: 1, 128>}, {transform_indices = @transform_12, window_bounds = array<i64: 1, 128>}, {transform_indices = @transform_13, window_bounds = array<i64: 4, 128>}]} {
    %c0 = arith.constant 0 : index
    %c0_0 = arith.constant 0 : index
    %0 = vector.load %arg1[%c0, %c0_0] : memref<128x128xbf16, #tpu.memory_space<vmem>>, vector<128x128xbf16>
    %c0_1 = arith.constant 0 : index
    %c0_2 = arith.constant 0 : index
    %1 = vector.load %arg4[%c0_1, %c0_2] : memref<128x128xbf16, #tpu.memory_space<vmem>>, vector<128x128xbf16>
    %cst = arith.constant dense<0.000000e+00> : vector<128x128xf32>
    %2 = tpu.matmul %1, %0, %cst {dimension_numbers = #tpu.dot_dimension_numbers<[1], [0], [0], [1], [0, 0, 1, 1], [], []>} : vector<128x128xbf16>, vector<128x128xbf16>, vector<128x128xf32> -> vector<128x128xf32>
    %c0_3 = arith.constant 0 : index
    %c0_4 = arith.constant 0 : index
    %3 = vector.load %arg5[%c0_3, %c0_4] : memref<128x1xf32, #tpu.memory_space<vmem>>, vector<128x1xf32>
    %4 = vector.broadcast %3 : vector<128x1xf32> to vector<128x128xf32>
    %5 = arith.addf %2, %4 : vector<128x128xf32>
    %c0_5 = arith.constant 0 : index
    %c0_6 = arith.constant 0 : index
    %6 = vector.load %arg6[%c0_5, %c0_6] : memref<128x128xbf16, #tpu.memory_space<vmem>>, vector<128x128xbf16>
    %7 = arith.truncf %5 : vector<128x128xf32> to vector<128x128xbf16>
    %cst_7 = arith.constant dense<0.000000e+00> : vector<128x128xf32>
    %8 = tpu.matmul %6, %7, %cst_7 {dimension_numbers = #tpu.dot_dimension_numbers<[1], [0], [0], [1], [0, 0, 1, 1], [], []>} : vector<128x128xbf16>, vector<128x128xbf16>, vector<128x128xf32> -> vector<128x128xf32>
    %c0_8 = arith.constant 0 : index
    %c0_9 = arith.constant 0 : index
    %9 = vector.load %arg7[%c0_8, %c0_9] : memref<128x1xf32, #tpu.memory_space<vmem>>, vector<128x1xf32>
    %10 = vector.broadcast %9 : vector<128x1xf32> to vector<128x128xf32>
    %11 = arith.addf %8, %10 : vector<128x128xf32>
    %12 = arith.mulf %11, %11 : vector<128x128xf32>
    %13 = arith.mulf %11, %12 : vector<128x128xf32>
    %cst_10 = arith.constant 4.471500e-02 : f32
    %14 = vector.broadcast %cst_10 : f32 to vector<128x128xf32>
    %15 = arith.mulf %14, %13 : vector<128x128xf32>
    %16 = arith.addf %11, %15 : vector<128x128xf32>
    %cst_11 = arith.constant 0.797884583 : f32
    %17 = vector.broadcast %cst_11 : f32 to vector<128x128xf32>
    %18 = arith.mulf %17, %16 : vector<128x128xf32>
    %19 = math.tanh %18 : vector<128x128xf32>
    %cst_12 = arith.constant 1.000000e+00 : f32
    %20 = vector.broadcast %cst_12 : f32 to vector<128x128xf32>
    %21 = arith.addf %20, %19 : vector<128x128xf32>
    %cst_13 = arith.constant 5.000000e-01 : f32
    %22 = vector.broadcast %cst_13 : f32 to vector<128x128xf32>
    %23 = arith.mulf %22, %21 : vector<128x128xf32>
    %24 = arith.mulf %11, %23 : vector<128x128xf32>
    %c0_14 = arith.constant 0 : index
    %c0_15 = arith.constant 0 : index
    %25 = vector.load %arg8[%c0_14, %c0_15] : memref<128x128xbf16, #tpu.memory_space<vmem>>, vector<128x128xbf16>
    %26 = arith.truncf %24 : vector<128x128xf32> to vector<128x128xbf16>
    %cst_16 = arith.constant dense<0.000000e+00> : vector<128x128xf32>
    %27 = tpu.matmul %25, %26, %cst_16 {dimension_numbers = #tpu.dot_dimension_numbers<[1], [0], [0], [1], [0, 0, 1, 1], [], []>} : vector<128x128xbf16>, vector<128x128xbf16>, vector<128x128xf32> -> vector<128x128xf32>
    %28 = arith.addf %5, %27 : vector<128x128xf32>
    %c0_17 = arith.constant 0 : index
    %c0_18 = arith.constant 0 : index
    %29 = vector.load %arg9[%c0_17, %c0_18] : memref<128x1xf32, #tpu.memory_space<vmem>>, vector<128x1xf32>
    %30 = vector.broadcast %29 : vector<128x1xf32> to vector<128x128xf32>
    %31 = arith.addf %28, %30 : vector<128x128xf32>
    %c0_19 = arith.constant 0 : index
    %c0_20 = arith.constant 0 : index
    %32 = vector.load %arg10[%c0_19, %c0_20] : memref<1x128xbf16, #tpu.memory_space<vmem>>, vector<1x128xbf16>
    %33 = arith.truncf %31 : vector<128x128xf32> to vector<128x128xbf16>
    %cst_21 = arith.constant dense<0.000000e+00> : vector<1x128xf32>
    %34 = tpu.matmul %32, %33, %cst_21 {dimension_numbers = #tpu.dot_dimension_numbers<[1], [0], [0], [1], [0, 0, 1, 1], [], []>} : vector<1x128xbf16>, vector<128x128xbf16>, vector<1x128xf32> -> vector<1x128xf32>
    %c0_22 = arith.constant 0 : index
    %c0_23 = arith.constant 0 : index
    %35 = vector.load %arg11[%c0_22, %c0_23] : memref<1x1xf32, #tpu.memory_space<vmem>>, vector<1x1xf32>
    %36 = vector.broadcast %35 : vector<1x1xf32> to vector<1x128xf32>
    %37 = arith.addf %34, %36 : vector<1x128xf32>
    %c0_24 = arith.constant 0 : index
    %c0_25 = arith.constant 0 : index
    %38 = vector.load %arg2[%c0_24, %c0_25] : memref<1x128xf32, #tpu.memory_space<vmem>>, vector<1x128xf32>
    %c0_26 = arith.constant 0 : index
    %c0_27 = arith.constant 0 : index
    %39 = vector.load %arg3[%c0_26, %c0_27] : memref<1x128xf32, #tpu.memory_space<vmem>>, vector<1x128xf32>
    %40 = arith.negf %37 : vector<1x128xf32>
    %41 = math.exp %40 : vector<1x128xf32>
    %cst_28 = arith.constant 1.000000e+00 : f32
    %42 = vector.broadcast %cst_28 : f32 to vector<1x128xf32>
    %43 = arith.addf %42, %41 : vector<1x128xf32>
    %44 = arith.divf %42, %43 : vector<1x128xf32>
    %c0_29 = arith.constant 0 : index
    %c0_30 = arith.constant 0 : index
    %45 = vector.load %arg12[%c0_29, %c0_30] : memref<1x128xf32, #tpu.memory_space<vmem>>, vector<1x128xf32>
    tpu.vector_store %arg12[%c0_29, %c0_30], %37 {strides = array<i32>} : memref<1x128xf32, #tpu.memory_space<vmem>>, vector<1x128xf32>,
    %c0_31 = arith.constant 0 : index
    %c0_32 = arith.constant 0 : index
    %46 = vector.load %arg13[%c0_31, %c0_32] : memref<1x128xf32, #tpu.memory_space<vmem>>, vector<1x128xf32>
    tpu.vector_store %arg13[%c0_31, %c0_32], %44 {strides = array<i32>} : memref<1x128xf32, #tpu.memory_space<vmem>>, vector<1x128xf32>,
    %cst_33 = arith.constant 0.000000e+00 : f32
    %47 = vector.broadcast %cst_33 : f32 to vector<1x128xf32>
    %48 = arith.maximumf %37, %47 : vector<1x128xf32>
    %49 = arith.mulf %37, %39 : vector<1x128xf32>
    %50 = arith.subf %48, %49 : vector<1x128xf32>
    %51 = math.absf %37 : vector<1x128xf32>
    %cst_34 = arith.constant 0.000000e+00 : f32
    %52 = vector.broadcast %cst_34 : f32 to vector<1x128xf32>
    %53 = arith.subf %52, %51 : vector<1x128xf32>
    %54 = math.exp %53 : vector<1x128xf32>
    %cst_35 = arith.constant 1.000000e+00 : f32
    %55 = vector.broadcast %cst_35 : f32 to vector<1x128xf32>
    %56 = arith.addf %55, %54 : vector<1x128xf32>
    %57 = math.log %56 : vector<1x128xf32>
    %58 = arith.addf %50, %57 : vector<1x128xf32>
    %59 = arith.mulf %44, %38 : vector<1x128xf32>
    %60 = arith.mulf %39, %38 : vector<1x128xf32>
    %61 = arith.mulf %58, %38 : vector<1x128xf32>
    %62 = tpu.concatenate %59, %60, %38, %61 in 0 : vector<1x128xf32>, vector<1x128xf32>, vector<1x128xf32>, vector<1x128xf32> -> vector<4x128xf32>
    %c128_i32 = arith.constant 128 : i32
    %63 = arith.muli %arg0, %c128_i32 : i32
    %64 = tpu.iota {dimensions = array<i32: 0>} : vector<128x128xi32>
    %65 = vector.broadcast %63 : i32 to vector<128x128xi32>
    %66 = arith.addi %65, %64 : vector<128x128xi32>
    %67 = tpu.iota {dimensions = array<i32: 1>} : vector<128x128xi32>
    %c16_i32 = arith.constant 16 : i32
    %68 = vector.broadcast %c16_i32 : i32 to vector<128x128xi32>
    %69 = arith.muli %67, %68 : vector<128x128xi32>
    %70 = arith.cmpi sge, %66, %69 : vector<128x128xi32>
    %c16_i32_36 = arith.constant 16 : i32
    %71 = vector.broadcast %c16_i32_36 : i32 to vector<128x128xi32>
    %72 = arith.addi %69, %71 : vector<128x128xi32>
    %73 = arith.cmpi slt, %66, %72 : vector<128x128xi32>
    %74 = arith.andi %70, %73 : vector<128x128xi1>
    %75 = arith.extui %74 : vector<128x128xi1> to vector<128x128xi32>
    %76 = arith.sitofp %75 : vector<128x128xi32> to vector<128x128xf32>
    %77 = arith.truncf %76 : vector<128x128xf32> to vector<128x128xbf16>
    %78 = arith.truncf %62 : vector<4x128xf32> to vector<4x128xbf16>
    %cst_37 = arith.constant dense<0.000000e+00> : vector<4x128xf32>
    %79 = tpu.matmul %78, %77, %cst_37 {dimension_numbers = #tpu.dot_dimension_numbers<[1], [0], [0], [1], [0, 0, 1, 1], [], []>} : vector<4x128xbf16>, vector<128x128xbf16>, vector<4x128xf32> -> vector<4x128xf32>
    %c0_38 = arith.constant 0 : index
    %c0_39 = arith.constant 0 : index
    %80 = vector.load %arg14[%c0_38, %c0_39] : memref<4x128xf32, #tpu.memory_space<vmem>>, vector<4x128xf32>
    tpu.vector_store %arg14[%c0_38, %c0_39], %79 {strides = array<i32>} : memref<4x128xf32, #tpu.memory_space<vmem>>, vector<4x128xf32>,
    return
  }
  func.func @transform_0(%arg0: i32) -> (i32, i32) {
    %c0_i32 = arith.constant 0 : i32
    %c0_i32_0 = arith.constant 0 : i32
    return %c0_i32, %arg0 : i32, i32
  }
  func.func @transform_1(%arg0: i32) -> (i32, i32) {
    %c0_i32 = arith.constant 0 : i32
    %c0_i32_0 = arith.constant 0 : i32
    return %c0_i32, %arg0 : i32, i32
  }
  func.func @transform_2(%arg0: i32) -> (i32, i32) {
    %c0_i32 = arith.constant 0 : i32
    %c0_i32_0 = arith.constant 0 : i32
    return %c0_i32, %arg0 : i32, i32
  }
  func.func @transform_3(%arg0: i32) -> (i32, i32) {
    %c0_i32 = arith.constant 0 : i32
    %c0_i32_0 = arith.constant 0 : i32
    %c0_i32_1 = arith.constant 0 : i32
    return %c0_i32, %c0_i32_0 : i32, i32
  }
  func.func @transform_4(%arg0: i32) -> (i32, i32) {
    %c0_i32 = arith.constant 0 : i32
    %c0_i32_0 = arith.constant 0 : i32
    %c0_i32_1 = arith.constant 0 : i32
    return %c0_i32, %c0_i32_0 : i32, i32
  }
  func.func @transform_5(%arg0: i32) -> (i32, i32) {
    %c0_i32 = arith.constant 0 : i32
    %c0_i32_0 = arith.constant 0 : i32
    %c0_i32_1 = arith.constant 0 : i32
    return %c0_i32, %c0_i32_0 : i32, i32
  }
  func.func @transform_6(%arg0: i32) -> (i32, i32) {
    %c0_i32 = arith.constant 0 : i32
    %c0_i32_0 = arith.constant 0 : i32
    %c0_i32_1 = arith.constant 0 : i32
    return %c0_i32, %c0_i32_0 : i32, i32
  }
  func.func @transform_7(%arg0: i32) -> (i32, i32) {
    %c0_i32 = arith.constant 0 : i32
    %c0_i32_0 = arith.constant 0 : i32
    %c0_i32_1 = arith.constant 0 : i32
    return %c0_i32, %c0_i32_0 : i32, i32
  }
  func.func @transform_8(%arg0: i32) -> (i32, i32) {
    %c0_i32 = arith.constant 0 : i32
    %c0_i32_0 = arith.constant 0 : i32
    %c0_i32_1 = arith.constant 0 : i32
    return %c0_i32, %c0_i32_0 : i32, i32
  }
  func.func @transform_9(%arg0: i32) -> (i32, i32) {
    %c0_i32 = arith.constant 0 : i32
    %c0_i32_0 = arith.constant 0 : i32
    %c0_i32_1 = arith.constant 0 : i32
    return %c0_i32, %c0_i32_0 : i32, i32
  }
  func.func @transform_10(%arg0: i32) -> (i32, i32) {
    %c0_i32 = arith.constant 0 : i32
    %c0_i32_0 = arith.constant 0 : i32
    %c0_i32_1 = arith.constant 0 : i32
    return %c0_i32, %c0_i32_0 : i32, i32
  }
  func.func @transform_11(%arg0: i32) -> (i32, i32) {
    %c0_i32 = arith.constant 0 : i32
    %c0_i32_0 = arith.constant 0 : i32
    return %c0_i32, %arg0 : i32, i32
  }
  func.func @transform_12(%arg0: i32) -> (i32, i32) {
    %c0_i32 = arith.constant 0 : i32
    %c0_i32_0 = arith.constant 0 : i32
    return %c0_i32, %arg0 : i32, i32
  }
  func.func @transform_13(%arg0: i32) -> (i32, i32) {
    %c0_i32 = arith.constant 0 : i32
    %c0_i32_0 = arith.constant 0 : i32
    return %c0_i32, %arg0 : i32, i32
  }
}

</mosaic_0001>

<llo_original>
// kernel: squeeze.10
$region0: #{squeeze.10}
  %s0 = inlined_call_operand.vmem [shape: f32[32], index: 0, kind: input, shape index: {}]
  %s1 = inlined_call_operand.hbm [shape: f32[2,1,4,4], index: 1, kind: output, shape index: {}]
  $region1: #{squeeze.10} parent=0
    #allocation0 [shape = 'u8[4096]{0}', space=vmem, size = 0x1000, scoped, tag = 'operand span for operand 1']
    #allocation1 [shape = 's32[1]{0}', space=sflag, size = 0x4, scoped, tag = 'scoped memory for squeeze.10']
    #allocation2 [shape = 'u8[8192]{0}', space=vmem, size = 0x2000, scoped, tag = 'scoped mem for output reshape']
    #allocation3 [shape = 'u8[4096]{0}', space=vmem, size = 0x1000, scoped, tag = 'scoped mem for input reshape']
    %2 = vsyncpa [#allocation1], 0
    %s4 = sshllo.u32 0, 1
    %v5 = vld [vmem:[%s0] sm:%s4]
    %6 = vst [vmem:[#allocation3] sm:%s4] %v5
    %v7 = vld [vmem:[#allocation3] sm:$0x1]
    %vm8 = vcmask 31744
    %9 = vst.msk [vmem:[#allocation2] sm:$0x1] %vm8, %v7
    %v10 = vld [vmem:[#allocation3] sm:$0x1]
    %11 = vrot.lane.b32.xlu0 %v10, 124
    %v12 = vpop.permute.xlu0 %11
    %vm13 = vcmask 31744
    %s14 = scalar_lea.vmem [#allocation2], 1
    %15 = vst.msk [vmem:[%s14] sm:$0x1] %vm13, %v12
    %v16 = vld [vmem:[#allocation3] sm:$0x1]
    %17 = vrot.lane.b32.xlu0 %v16, 120
    %v18 = vpop.permute.xlu0 %17
    %vm19 = vcmask 31744
    %s20 = scalar_lea.vmem [#allocation2], 2
    %21 = vst.msk [vmem:[%s20] sm:$0x1] %vm19, %v18
    %v22 = vld [vmem:[#allocation3] sm:$0x1]
    %23 = vrot.lane.b32.xlu0 %v22, 116
    %v24 = vpop.permute.xlu0 %23
    %vm25 = vcmask 31744
    %s26 = scalar_lea.vmem [#allocation2], 3
    %27 = vst.msk [vmem:[%s26] sm:$0x1] %vm25, %v24
    %v28 = vld [vmem:[#allocation3] sm:$0x1]
    %29 = vrot.lane.b32.xlu0 %v28, 112
    %v30 = vpop.permute.xlu0 %29
    %vm31 = vcmask 31744
    %s32 = scalar_lea.vmem [#allocation2], 8
    %33 = vst.msk [vmem:[%s32] sm:$0x1] %vm31, %v30
    %v34 = vld [vmem:[#allocation3] sm:$0x1]
    %35 = vrot.lane.b32.xlu0 %v34, 108
    %v36 = vpop.permute.xlu0 %35
    %vm37 = vcmask 31744
    %s38 = scalar_lea.vmem [#allocation2], 9
    %39 = vst.msk [vmem:[%s38] sm:$0x1] %vm37, %v36
    %v40 = vld [vmem:[#allocation3] sm:$0x1]
    %41 = vrot.lane.b32.xlu0 %v40, 104
    %v42 = vpop.permute.xlu0 %41
    %vm43 = vcmask 31744
    %s44 = scalar_lea.vmem [#allocation2], 10
    %45 = vst.msk [vmem:[%s44] sm:$0x1] %vm43, %v42
    %v46 = vld [vmem:[#allocation3] sm:$0x1]
    %47 = vrot.lane.b32.xlu0 %v46, 100
    %v48 = vpop.permute.xlu0 %47
    %vm49 = vcmask 31744
    %s50 = scalar_lea.vmem [#allocation2], 11
    %51 = vst.msk [vmem:[%s50] sm:$0x1] %vm49, %v48
    %s53 = sshllo.u32 0, 4
    %v55 = vld [vmem:[#allocation2] sm:%s53]
    %s56 = sshllo.u32 0, 4
    %57 = vst [vmem:[#allocation0] sm:%s56] %v55
    %s58 = scalar_lea.vmem [#allocation2], 8
    %v59 = vld [vmem:[%s58] sm:%s53]
    %s60 = sshllo.u32 0, 4
    %s61 = scalar_lea.vmem [#allocation0], 4
    %62 = vst [vmem:[%s61] sm:%s60] %v59
    %s64 = ssub.s32 128, 128
    %65 = vsyncadd [#allocation1], %s64
    %s67 = sshll.u32 [#allocation0], 4
    %s68 = int_to_ptr.vmem [resolvable:$true] %s67
    %70 = dma.vmem_to_hbm [thread:$0]  %s68, 128, %s1, [#allocation1]
    %71 = dma.done [#allocation1], 128
    %72 = vsyncpa [#allocation1], 1

// kernel: medsam_cancer_detector_v2_forward.1
$region0: #{medsam_cancer_detector_v2_forward.1}
  #allocation0 [shape = 'u32[]', space=smem, size = 0x4, offset = 0x4, fixed_abs, tag = 'smem constant byte address 0x4 - core index']
  #allocation1 [shape = 'u32[144,128]{1,0:T(1,128)}', space=vmem, size = 0x12000, scoped, tag = 'internal scratch']
  #allocation2 [shape = 'f32[1,1]{1,0:T(1,128)S(1)}', space=vmem, size = 0x200, scoped, tag = 'scoped memory for medsam_cancer_detector_v2_forward.1']
  %s0 = inlined_call_operand.vmem [shape: bf16[128,128], index: 0, kind: input, shape index: {}]
  %s1 = inlined_call_operand.vmem [shape: f32[1,128], index: 1, kind: input, shape index: {}]
  %s2 = inlined_call_operand.vmem [shape: f32[1,128], index: 2, kind: input, shape index: {}]
  %s3 = inlined_call_operand.vmem [shape: bf16[128,128], index: 3, kind: input, shape index: {}]
  %s4 = inlined_call_operand.vmem [shape: f32[128,1], index: 4, kind: input, shape index: {}]
  %s5 = inlined_call_operand.vmem [shape: bf16[128,128], index: 5, kind: input, shape index: {}]
  %s6 = inlined_call_operand.vmem [shape: f32[128,1], index: 6, kind: input, shape index: {}]
  %s7 = inlined_call_operand.vmem [shape: bf16[128,128], index: 7, kind: input, shape index: {}]
  %s8 = inlined_call_operand.vmem [shape: f32[128,1], index: 8, kind: input, shape index: {}]
  %s9 = inlined_call_operand.vmem [shape: bf16[1,128], index: 9, kind: input, shape index: {}]
  %s10 = inlined_call_operand.<no memory space> [shape: f32[1,1], index: 10, kind: input, shape index: {}]
  %s11 = inlined_call_operand.vmem [shape: f32[1,128], index: 11, kind: output, shape index: {0}]
  %s12 = inlined_call_operand.vmem [shape: f32[1,128], index: 12, kind: output, shape index: {1}]
  %s13 = inlined_call_operand.vmem [shape: f32[4,128], index: 13, kind: output, shape index: {2}]
  %14 = xla_tuple %s11, %s12, %s13
  %s15 = sld [smem:[#allocation0]]
  $region70: #{medsam_cancer_detector_v2_forward.1} parent=0
    _
  %s17 = ssub.s32 1, %s15
  %s18 = scalar_select 0, %s17, %s15
  %v19 = vstv %s10
  %20 = vst [vmem:[#allocation2] sm:$0x1] %v19
  // Predicated region
  $region2: #{medsam_cancer_detector_v2_forward.1} parent=0 // pred_check
    _
  $region3: #{medsam_cancer_detector_v2_forward.1} parent=0 // pred_check_branch
    %22 = sbr.rel (0) target = $region5
  $region4: #{medsam_cancer_detector_v2_forward.1} parent=0 // pred_region
    _
  $region5: #{medsam_cancer_detector_v2_forward.1} parent=0 // pred_fallthru
    _
  // Predicated region
  $region6: #{medsam_cancer_detector_v2_forward.1} parent=0 // pred_check
    _
  $region7: #{medsam_cancer_detector_v2_forward.1} parent=0 // pred_check_branch
    %24 = sbr.rel (0) target = $region9
  $region8: #{medsam_cancer_detector_v2_forward.1} parent=0 // pred_region
    _
  $region9: #{medsam_cancer_detector_v2_forward.1} parent=0 // pred_fallthru
    _
  // Predicated region
  $region10: #{medsam_cancer_detector_v2_forward.1} parent=0 // pred_check
    _
  $region11: #{medsam_cancer_detector_v2_forward.1} parent=0 // pred_check_branch
    %26 = sbr.rel (0) target = $region13
  $region12: #{medsam_cancer_detector_v2_forward.1} parent=0 // pred_region
    _
  $region13: #{medsam_cancer_detector_v2_forward.1} parent=0 // pred_fallthru
    _
  // Predicated region
  $region14: #{medsam_cancer_detector_v2_forward.1} parent=0 // pred_check
    _
  $region15: #{medsam_cancer_detector_v2_forward.1} parent=0 // pred_check_branch
    %28 = sbr.rel (0) target = $region17
  $region16: #{medsam_cancer_detector_v2_forward.1} parent=0 // pred_region
    _
  $region17: #{medsam_cancer_detector_v2_forward.1} parent=0 // pred_fallthru
    _
  // Predicated region
  $region18: #{medsam_cancer_detector_v2_forward.1} parent=0 // pred_check
    _
  $region19: #{medsam_cancer_detector_v2_forward.1} parent=0 // pred_check_branch
    %30 = sbr.rel (0) target = $region21
  $region20: #{medsam_cancer_detector_v2_forward.1} parent=0 // pred_region
    _
  $region21: #{medsam_cancer_detector_v2_forward.1} parent=0 // pred_fallthru
    _
  // Predicated region
  $region22: #{medsam_cancer_detector_v2_forward.1} parent=0 // pred_check
    _
  $region23: #{medsam_cancer_detector_v2_forward.1} parent=0 // pred_check_branch
    %32 = sbr.rel (0) target = $region25
  $region24: #{medsam_cancer_detector_v2_forward.1} parent=0 // pred_region
    _
  $region25: #{medsam_cancer_detector_v2_forward.1} parent=0 // pred_fallthru
    _
  // Predicated region
  $region26: #{medsam_cancer_detector_v2_forward.1} parent=0 // pred_check
    _
  $region27: #{medsam_cancer_detector_v2_forward.1} parent=0 // pred_check_branch
    %34 = sbr.rel (0) target = $region29
  $region28: #{medsam_cancer_detector_v2_forward.1} parent=0 // pred_region
    _
  $region29: #{medsam_cancer_detector_v2_forward.1} parent=0 // pred_fallthru
    _
  // Predicated region
  $region30: #{medsam_cancer_detector_v2_forward.1} parent=0 // pred_check
    _
  $region31: #{medsam_cancer_detector_v2_forward.1} parent=0 // pred_check_branch
    %36 = sbr.rel (0) target = $region33
  $region32: #{medsam_cancer_detector_v2_forward.1} parent=0 // pred_region
    _
  $region33: #{medsam_cancer_detector_v2_forward.1} parent=0 // pred_fallthru
    _
  // Predicated region
  $region34: #{medsam_cancer_detector_v2_forward.1} parent=0 // pred_check
    _
  $region35: #{medsam_cancer_detector_v2_forward.1} parent=0 // pred_check_branch
    %38 = sbr.rel (0) target = $region37
  $region36: #{medsam_cancer_detector_v2_forward.1} parent=0 // pred_region
    _
  $region37: #{medsam_cancer_detector_v2_forward.1} parent=0 // pred_fallthru
    _
  // Predicated region
  $region38: #{medsam_cancer_detector_v2_forward.1} parent=0 // pred_check
    _
  $region39: #{medsam_cancer_detector_v2_forward.1} parent=0 // pred_check_branch
    %40 = sbr.rel (0) target = $region41
  $region40: #{medsam_cancer_detector_v2_forward.1} parent=0 // pred_region
    _
  $region41: #{medsam_cancer_detector_v2_forward.1} parent=0 // pred_fallthru
    _
  // Predicated region
  $region42: #{medsam_cancer_detector_v2_forward.1} parent=0 // pred_check
    _
  $region43: #{medsam_cancer_detector_v2_forward.1} parent=0 // pred_check_branch
    %42 = sbr.rel (0) target = $region45
  $region44: #{medsam_cancer_detector_v2_forward.1} parent=0 // pred_region
    _
  $region45: #{medsam_cancer_detector_v2_forward.1} parent=0 // pred_fallthru
    _
  %v44 = vld [vmem:[%s0] sm:$0xf]
  %v45 = vld [vmem:[%s0 + $0x4] sm:$0xf]
  %v46 = vld [vmem:[%s0 + $0x8] sm:$0xf]
  %v47 = vld [vmem:[%s0 + $0xc] sm:$0xf]
  %v48 = vld [vmem:[%s0 + $0x10] sm:$0xf]
  %v49 = vld [vmem:[%s0 + $0x14] sm:$0xf]
  %v50 = vld [vmem:[%s0 + $0x18] sm:$0xf]
  %v51 = vld [vmem:[%s0 + $0x1c] sm:$0xf]
  %v52 = vld [vmem:[%s0 + $0x20] sm:$0xf]
  %v53 = vld [vmem:[%s0 + $0x24] sm:$0xf]
  %v54 = vld [vmem:[%s0 + $0x28] sm:$0xf]
  %v55 = vld [vmem:[%s0 + $0x2c] sm:$0xf]
  %v56 = vld [vmem:[%s0 + $0x30] sm:$0xf]
  %v57 = vld [vmem:[%s0 + $0x34] sm:$0xf]
  %v58 = vld [vmem:[%s0 + $0x38] sm:$0xf]
  %v59 = vld [vmem:[%s0 + $0x3c] sm:$0xf]
  %v60 = vld [vmem:[%s3] sm:$0xf]
  %v61 = vld [vmem:[%s3 + $0x4] sm:$0xf]
  %v62 = vld [vmem:[%s3 + $0x8] sm:$0xf]
  %v63 = vld [vmem:[%s3 + $0xc] sm:$0xf]
  %v64 = vld [vmem:[%s3 + $0x10] sm:$0xf]
  %v65 = vld [vmem:[%s3 + $0x14] sm:$0xf]
  %v66 = vld [vmem:[%s3 + $0x18] sm:$0xf]
  %v67 = vld [vmem:[%s3 + $0x1c] sm:$0xf]
  %v68 = vld [vmem:[%s3 + $0x20] sm:$0xf]
  %v69 = vld [vmem:[%s3 + $0x24] sm:$0xf]
  %v70 = vld [vmem:[%s3 + $0x28] sm:$0xf]
  %v71 = vld [vmem:[%s3 + $0x2c] sm:$0xf]
  %v72 = vld [vmem:[%s3 + $0x30] sm:$0xf]
  %v73 = vld [vmem:[%s3 + $0x34] sm:$0xf]
  %v74 = vld [vmem:[%s3 + $0x38] sm:$0xf]
  %v75 = vld [vmem:[%s3 + $0x3c] sm:$0xf]
  %v76 = vld [vmem:[%s4] sm:$0xff]
  %v77 = vld [vmem:[%s4 + $0x8] sm:$0xff]
  %v78 = vld [vmem:[%s4 + $0x10] sm:$0xff]
  %v79 = vld [vmem:[%s4 + $0x18] sm:$0xff]
  %v80 = vld [vmem:[%s4 + $0x20] sm:$0xff]
  %v81 = vld [vmem:[%s4 + $0x28] sm:$0xff]
  %v82 = vld [vmem:[%s4 + $0x30] sm:$0xff]
  %v83 = vld [vmem:[%s4 + $0x38] sm:$0xff]
  %v84 = vld [vmem:[%s4 + $0x40] sm:$0xff]
  %v85 = vld [vmem:[%s4 + $0x48] sm:$0xff]
  %v86 = vld [vmem:[%s4 + $0x50] sm:$0xff]
  %v87 = vld [vmem:[%s4 + $0x58] sm:$0xff]
  %v88 = vld [vmem:[%s4 + $0x60] sm:$0xff]
  %v89 = vld [vmem:[%s4 + $0x68] sm:$0xff]
  %v90 = vld [vmem:[%s4 + $0x70] sm:$0xff]
  %v91 = vld [vmem:[%s4 + $0x78] sm:$0xff]
  %93 = vset.pattern.permute.xlu0 0
  %94 = vperm.xlu0 %93, %v76
  %v95 = vpop.permute.xlu0 %94
  %98 = vset.pattern.permute.xlu0 0
  %99 = vperm.xlu0 %98, %v77
  %v100 = vpop.permute.xlu0 %99
  %103 = vset.pattern.permute.xlu0 0
  %104 = vperm.xlu0 %103, %v78
  %v105 = vpop.permute.xlu0 %104
  %108 = vset.pattern.permute.xlu0 0
  %109 = vperm.xlu0 %108, %v79
  %v110 = vpop.permute.xlu0 %109
  %113 = vset.pattern.permute.xlu0 0
  %114 = vperm.xlu0 %113, %v80
  %v115 = vpop.permute.xlu0 %114
  %118 = vset.pattern.permute.xlu0 0
  %119 = vperm.xlu0 %118, %v81
  %v120 = vpop.permute.xlu0 %119
  %123 = vset.pattern.permute.xlu0 0
  %124 = vperm.xlu0 %123, %v82
  %v125 = vpop.permute.xlu0 %124
  %128 = vset.pattern.permute.xlu0 0
  %129 = vperm.xlu0 %128, %v83
  %v130 = vpop.permute.xlu0 %129
  %133 = vset.pattern.permute.xlu0 0
  %134 = vperm.xlu0 %133, %v84
  %v135 = vpop.permute.xlu0 %134
  %138 = vset.pattern.permute.xlu0 0
  %139 = vperm.xlu0 %138, %v85
  %v140 = vpop.permute.xlu0 %139
  %143 = vset.pattern.permute.xlu0 0
  %144 = vperm.xlu0 %143, %v86
  %v145 = vpop.permute.xlu0 %144
  %148 = vset.pattern.permute.xlu0 0
  %149 = vperm.xlu0 %148, %v87
  %v150 = vpop.permute.xlu0 %149
  %153 = vset.pattern.permute.xlu0 0
  %154 = vperm.xlu0 %153, %v88
  %v155 = vpop.permute.xlu0 %154
  %158 = vset.pattern.permute.xlu0 0
  %159 = vperm.xlu0 %158, %v89
  %v160 = vpop.permute.xlu0 %159
  %163 = vset.pattern.permute.xlu0 0
  %164 = vperm.xlu0 %163, %v90
  %v165 = vpop.permute.xlu0 %164
  %168 = vset.pattern.permute.xlu0 0
  %169 = vperm.xlu0 %168, %v91
  %v170 = vpop.permute.xlu0 %169
  %v188 = vunpack.c.l.b16 %v60
  %v189 = vunpack.c.l.b16 %v61
  %v190 = vunpack.c.l.b16 %v62
  %v191 = vunpack.c.l.b16 %v63
  %v192 = vunpack.c.l.b16 %v64
  %v193 = vunpack.c.l.b16 %v65
  %v194 = vunpack.c.l.b16 %v66
  %v195 = vunpack.c.l.b16 %v67
  %v196 = vunpack.c.l.b16 %v68
  %v197 = vunpack.c.l.b16 %v69
  %v198 = vunpack.c.l.b16 %v70
  %v199 = vunpack.c.l.b16 %v71
  %v200 = vunpack.c.l.b16 %v72
  %v201 = vunpack.c.l.b16 %v73
  %v202 = vunpack.c.l.b16 %v74
  %v203 = vunpack.c.l.b16 %v75
  %v204 = vpack.c.b16 %v189, %v188
  %v205 = vpack.c.b16 %v191, %v190
  %v206 = vpack.c.b16 %v193, %v192
  %v207 = vpack.c.b16 %v195, %v194
  %v208 = vpack.c.b16 %v197, %v196
  %v209 = vpack.c.b16 %v199, %v198
  %v210 = vpack.c.b16 %v201, %v200
  %v211 = vpack.c.b16 %v203, %v202
  %v236 = vunpack.c.l.b16 %v44
  %v237 = vunpack.c.l.b16 %v45
  %v238 = vunpack.c.l.b16 %v46
  %v239 = vunpack.c.l.b16 %v47
  %v240 = vunpack.c.l.b16 %v48
  %v241 = vunpack.c.l.b16 %v49
  %v242 = vunpack.c.l.b16 %v50
  %v243 = vunpack.c.l.b16 %v51
  %v244 = vunpack.c.l.b16 %v52
  %v245 = vunpack.c.l.b16 %v53
  %v246 = vunpack.c.l.b16 %v54
  %v247 = vunpack.c.l.b16 %v55
  %v248 = vunpack.c.l.b16 %v56
  %v249 = vunpack.c.l.b16 %v57
  %v250 = vunpack.c.l.b16 %v58
  %v251 = vunpack.c.l.b16 %v59
  %v252 = vpack.c.b16 %v237, %v236
  %v253 = vpack.c.b16 %v239, %v238
  %v254 = vpack.c.b16 %v241, %v240
  %v255 = vpack.c.b16 %v243, %v242
  %v256 = vpack.c.b16 %v245, %v244
  %v257 = vpack.c.b16 %v247, %v246
  %v258 = vpack.c.b16 %v249, %v248
  %v259 = vpack.c.b16 %v251, %v250
  %268 = vmatprep.subr.bf16.mxu0 0
  %269 = vmatpush1.bf16.msra.mxu0 %v252
  %270 = vmatprep.subr.bf16.mxu0 0
  %271 = vmatpush1.bf16.msra.mxu0 %v253
  %272 = vmatprep.subr.bf16.mxu0 0
  %273 = vmatpush1.bf16.msra.mxu0 %v254
  %274 = vmatprep.subr.bf16.mxu0 0
  %275 = vmatpush1.bf16.msra.mxu0 %v255
  %276 = vmatprep.subr.bf16.mxu0 0
  %277 = vmatpush1.bf16.msra.mxu0 %v256
  %278 = vmatprep.subr.bf16.mxu0 0
  %279 = vmatpush1.bf16.msra.mxu0 %v257
  %280 = vmatprep.subr.bf16.mxu0 0
  %281 = vmatpush1.bf16.msra.mxu0 %v258
  %282 = vmatprep.subr.bf16.mxu0 0
  %283 = vmatpush1.bf16.msra.mxu0 %v259
  %284 = vmatprep.subr.bf16.mxu0 0
  %285 = vmatpush1.bf16.msra.mxu0 0
  %286 = vmatprep.subr.bf16.mxu0 0
  %287 = vmatpush1.bf16.msra.mxu0 0
  %288 = vmatprep.subr.bf16.mxu0 0
  %289 = vmatpush1.bf16.msra.mxu0 0
  %290 = vmatprep.subr.bf16.mxu0 0
  %291 = vmatpush1.bf16.msra.mxu0 0
  %292 = vmatprep.subr.bf16.mxu0 0
  %293 = vmatpush1.bf16.msra.mxu0 0
  %294 = vmatprep.subr.bf16.mxu0 0
  %295 = vmatpush1.bf16.msra.mxu0 0
  %296 = vmatprep.subr.bf16.mxu0 0
  %297 = vmatpush1.bf16.msra.mxu0 0
  %298 = vmatprep.subr.bf16.mxu0 0
  %299 = vmatpush1.bf16.msra.mxu0 0
  %300 = vmatprep.mubr.bf16.mxu0 0
  %301 = vmatmul.mubr.bf16.gmra.mrb[0].mxu0 %v204
  %v302 = vpop.f32.mrb[0].mxu0
  %v303 = vadd.f32 %v95, %v302
  %v304 = vpop.f32.mrb[0].mxu0
  %v305 = vpop.f32.mrb[0].mxu0
  %v306 = vadd.f32 %v100, %v305
  %v307 = vpop.f32.mrb[0].mxu0
  %308 = vmatprep.mubr.bf16.mxu0 0
  %309 = vmatmul.mubr.bf16.gmra.mrb[0].mxu0 %v205
  %v310 = vpop.f32.mrb[0].mxu0
  %v311 = vadd.f32 %v105, %v310
  %v312 = vpop.f32.mrb[0].mxu0
  %v313 = vpop.f32.mrb[0].mxu0
  %v314 = vadd.f32 %v110, %v313
  %v315 = vpop.f32.mrb[0].mxu0
  %316 = vmatprep.mubr.bf16.mxu0 0
  %317 = vmatmul.mubr.bf16.gmra.mrb[0].mxu0 %v206
  %v318 = vpop.f32.mrb[0].mxu0
  %v319 = vadd.f32 %v115, %v318
  %v320 = vpop.f32.mrb[0].mxu0
  %v321 = vpop.f32.mrb[0].mxu0
  %v322 = vadd.f32 %v120, %v321
  %v323 = vpop.f32.mrb[0].mxu0
  %324 = vmatprep.mubr.bf16.mxu0 0
  %325 = vmatmul.mubr.bf16.gmra.mrb[0].mxu0 %v207
  %v326 = vpop.f32.mrb[0].mxu0
  %v327 = vadd.f32 %v125, %v326
  %v328 = vpop.f32.mrb[0].mxu0
  %v329 = vpop.f32.mrb[0].mxu0
  %v330 = vadd.f32 %v130, %v329
  %v331 = vpop.f32.mrb[0].mxu0
  %332 = vmatprep.mubr.bf16.mxu0 0
  %333 = vmatmul.mubr.bf16.gmra.mrb[0].mxu0 %v208
  %v334 = vpop.f32.mrb[0].mxu0
  %v335 = vadd.f32 %v135, %v334
  %v336 = vpop.f32.mrb[0].mxu0
  %v337 = vpop.f32.mrb[0].mxu0
  %v338 = vadd.f32 %v140, %v337
  %v339 = vpop.f32.mrb[0].mxu0
  %340 = vmatprep.mubr.bf16.mxu0 0
  %341 = vmatmul.mubr.bf16.gmra.mrb[0].mxu0 %v209
  %v342 = vpop.f32.mrb[0].mxu0
  %v343 = vadd.f32 %v145, %v342
  %v344 = vpop.f32.mrb[0].mxu0
  %v345 = vpop.f32.mrb[0].mxu0
  %v346 = vadd.f32 %v150, %v345
  %v347 = vpop.f32.mrb[0].mxu0
  %348 = vmatprep.mubr.bf16.mxu0 0
  %349 = vmatmul.mubr.bf16.gmra.mrb[0].mxu0 %v210
  %v350 = vpop.f32.mrb[0].mxu0
  %v351 = vadd.f32 %v155, %v350
  %v352 = vpop.f32.mrb[0].mxu0
  %v353 = vpop.f32.mrb[0].mxu0
  %v354 = vadd.f32 %v160, %v353
  %v355 = vpop.f32.mrb[0].mxu0
  %356 = vmatprep.mubr.bf16.mxu0 0
  %357 = vmatmul.mubr.bf16.gmra.mrb[0].mxu0 %v211
  %v358 = vpop.f32.mrb[0].mxu0
  %v359 = vadd.f32 %v165, %v358
  %v360 = vpop.f32.mrb[0].mxu0
  %v361 = vpop.f32.mrb[0].mxu0
  %v362 = vadd.f32 %v170, %v361
  %v363 = vpop.f32.mrb[0].mxu0
  %364 = vdwg.mxu0
  %v365 = vld [vmem:[%s5] sm:$0xf]
  %v366 = vld [vmem:[%s5 + $0x4] sm:$0xf]
  %v367 = vld [vmem:[%s5 + $0x8] sm:$0xf]
  %v368 = vld [vmem:[%s5 + $0xc] sm:$0xf]
  %v369 = vld [vmem:[%s5 + $0x10] sm:$0xf]
  %v370 = vld [vmem:[%s5 + $0x14] sm:$0xf]
  %v371 = vld [vmem:[%s5 + $0x18] sm:$0xf]
  %v372 = vld [vmem:[%s5 + $0x1c] sm:$0xf]
  %v373 = vld [vmem:[%s5 + $0x20] sm:$0xf]
  %v374 = vld [vmem:[%s5 + $0x24] sm:$0xf]
  %v375 = vld [vmem:[%s5 + $0x28] sm:$0xf]
  %v376 = vld [vmem:[%s5 + $0x2c] sm:$0xf]
  %v377 = vld [vmem:[%s5 + $0x30] sm:$0xf]
  %v378 = vld [vmem:[%s5 + $0x34] sm:$0xf]
  %v379 = vld [vmem:[%s5 + $0x38] sm:$0xf]
  %v380 = vld [vmem:[%s5 + $0x3c] sm:$0xf]
  %v381 = vpack.c.bf16 %v306, %v303
  %v382 = vpack.c.bf16 %v314, %v311
  %v383 = vpack.c.bf16 %v322, %v319
  %v384 = vpack.c.bf16 %v330, %v327
  %v385 = vpack.c.bf16 %v338, %v335
  %v386 = vpack.c.bf16 %v346, %v343
  %v387 = vpack.c.bf16 %v354, %v351
  %v388 = vpack.c.bf16 %v362, %v359
  %v389 = vld [vmem:[%s6] sm:$0xff]
  %v390 = vld [vmem:[%s6 + $0x8] sm:$0xff]
  %v391 = vld [vmem:[%s6 + $0x10] sm:$0xff]
  %v392 = vld [vmem:[%s6 + $0x18] sm:$0xff]
  %v393 = vld [vmem:[%s6 + $0x20] sm:$0xff]
  %v394 = vld [vmem:[%s6 + $0x28] sm:$0xff]
  %v395 = vld [vmem:[%s6 + $0x30] sm:$0xff]
  %v396 = vld [vmem:[%s6 + $0x38] sm:$0xff]
  %v397 = vld [vmem:[%s6 + $0x40] sm:$0xff]
  %v398 = vld [vmem:[%s6 + $0x48] sm:$0xff]
  %v399 = vld [vmem:[%s6 + $0x50] sm:$0xff]
  %v400 = vld [vmem:[%s6 + $0x58] sm:$0xff]
  %v401 = vld [vmem:[%s6 + $0x60] sm:$0xff]
  %v402 = vld [vmem:[%s6 + $0x68] sm:$0xff]
  %v403 = vld [vmem:[%s6 + $0x70] sm:$0xff]
  %v404 = vld [vmem:[%s6 + $0x78] sm:$0xff]
  %406 = vset.pattern.permute.xlu0 0
  %407 = vperm.xlu0 %406, %v389
  %v408 = vpop.permute.xlu0 %407
  %411 = vset.pattern.permute.xlu0 0
  %412 = vperm.xlu0 %411, %v390
  %v413 = vpop.permute.xlu0 %412
  %416 = vset.pattern.permute.xlu0 0
  %417 = vperm.xlu0 %416, %v391
  %v418 = vpop.permute.xlu0 %417
  %421 = vset.pattern.permute.xlu0 0
  %422 = vperm.xlu0 %421, %v392
  %v423 = vpop.permute.xlu0 %422
  %426 = vset.pattern.permute.xlu0 0
  %427 = vperm.xlu0 %426, %v393
  %v428 = vpop.permute.xlu0 %427
  %431 = vset.pattern.permute.xlu0 0
  %432 = vperm.xlu0 %431, %v394
  %v433 = vpop.permute.xlu0 %432
  %436 = vset.pattern.permute.xlu0 0
  %437 = vperm.xlu0 %436, %v395
  %v438 = vpop.permute.xlu0 %437
  %441 = vset.pattern.permute.xlu0 0
  %442 = vperm.xlu0 %441, %v396
  %v443 = vpop.permute.xlu0 %442
  %446 = vset.pattern.permute.xlu0 0
  %447 = vperm.xlu0 %446, %v397
  %v448 = vpop.permute.xlu0 %447
  %451 = vset.pattern.permute.xlu0 0
  %452 = vperm.xlu0 %451, %v398
  %v453 = vpop.permute.xlu0 %452
  %456 = vset.pattern.permute.xlu0 0
  %457 = vperm.xlu0 %456, %v399
  %v458 = vpop.permute.xlu0 %457
  %461 = vset.pattern.permute.xlu0 0
  %462 = vperm.xlu0 %461, %v400
  %v463 = vpop.permute.xlu0 %462
  %466 = vset.pattern.permute.xlu0 0
  %467 = vperm.xlu0 %466, %v401
  %v468 = vpop.permute.xlu0 %467
  %471 = vset.pattern.permute.xlu0 0
  %472 = vperm.xlu0 %471, %v402
  %v473 = vpop.permute.xlu0 %472
  %476 = vset.pattern.permute.xlu0 0
  %477 = vperm.xlu0 %476, %v403
  %v478 = vpop.permute.xlu0 %477
  %481 = vset.pattern.permute.xlu0 0
  %482 = vperm.xlu0 %481, %v404
  %v483 = vpop.permute.xlu0 %482
  %v501 = vunpack.c.l.b16 %v365
  %v502 = vunpack.c.l.b16 %v366
  %v503 = vunpack.c.l.b16 %v367
  %v504 = vunpack.c.l.b16 %v368
  %v505 = vunpack.c.l.b16 %v369
  %v506 = vunpack.c.l.b16 %v370
  %v507 = vunpack.c.l.b16 %v371
  %v508 = vunpack.c.l.b16 %v372
  %v509 = vunpack.c.l.b16 %v373
  %v510 = vunpack.c.l.b16 %v374
  %v511 = vunpack.c.l.b16 %v375
  %v512 = vunpack.c.l.b16 %v376
  %v513 = vunpack.c.l.b16 %v377
  %v514 = vunpack.c.l.b16 %v378
  %v515 = vunpack.c.l.b16 %v379
  %v516 = vunpack.c.l.b16 %v380
  %v517 = vpack.c.b16 %v502, %v501
  %v518 = vpack.c.b16 %v504, %v503
  %v519 = vpack.c.b16 %v506, %v505
  %v520 = vpack.c.b16 %v508, %v507
  %v521 = vpack.c.b16 %v510, %v509
  %v522 = vpack.c.b16 %v512, %v511
  %v523 = vpack.c.b16 %v514, %v513
  %v524 = vpack.c.b16 %v516, %v515
  %533 = vmatprep.subr.bf16.mxu0 0
  %534 = vmatpush1.bf16.msra.mxu0 %v381
  %535 = vmatprep.subr.bf16.mxu0 0
  %536 = vmatpush1.bf16.msra.mxu0 %v382
  %537 = vmatprep.subr.bf16.mxu0 0
  %538 = vmatpush1.bf16.msra.mxu0 %v383
  %539 = vmatprep.subr.bf16.mxu0 0
  %540 = vmatpush1.bf16.msra.mxu0 %v384
  %541 = vmatprep.subr.bf16.mxu0 0
  %542 = vmatpush1.bf16.msra.mxu0 %v385
  %543 = vmatprep.subr.bf16.mxu0 0
  %544 = vmatpush1.bf16.msra.mxu0 %v386
  %545 = vmatprep.subr.bf16.mxu0 0
  %546 = vmatpush1.bf16.msra.mxu0 %v387
  %547 = vmatprep.subr.bf16.mxu0 0
  %548 = vmatpush1.bf16.msra.mxu0 %v388
  %549 = vmatprep.subr.bf16.mxu0 0
  %550 = vmatpush1.bf16.msra.mxu0 0
  %551 = vmatprep.subr.bf16.mxu0 0
  %552 = vmatpush1.bf16.msra.mxu0 0
  %553 = vmatprep.subr.bf16.mxu0 0
  %554 = vmatpush1.bf16.msra.mxu0 0
  %555 = vmatprep.subr.bf16.mxu0 0
  %556 = vmatpush1.bf16.msra.mxu0 0
  %557 = vmatprep.subr.bf16.mxu0 0
  %558 = vmatpush1.bf16.msra.mxu0 0
  %559 = vmatprep.subr.bf16.mxu0 0
  %560 = vmatpush1.bf16.msra.mxu0 0
  %561 = vmatprep.subr.bf16.mxu0 0
  %562 = vmatpush1.bf16.msra.mxu0 0
  %563 = vmatprep.subr.bf16.mxu0 0
  %564 = vmatpush1.bf16.msra.mxu0 0
  %565 = vmatprep.mubr.bf16.mxu0 0
  %566 = vmatmul.mubr.bf16.gmra.mrb[0].mxu0 %v517
  %v567 = vpop.f32.mrb[0].mxu0
  %v568 = vadd.f32 %v408, %v567
  %v569 = vpop.f32.mrb[0].mxu0
  %v570 = vpop.f32.mrb[0].mxu0
  %v571 = vadd.f32 %v413, %v570
  %v572 = vpop.f32.mrb[0].mxu0
  %573 = vmatprep.mubr.bf16.mxu0 0
  %574 = vmatmul.mubr.bf16.gmra.mrb[0].mxu0 %v518
  %v575 = vpop.f32.mrb[0].mxu0
  %v576 = vadd.f32 %v418, %v575
  %v577 = vpop.f32.mrb[0].mxu0
  %v578 = vpop.f32.mrb[0].mxu0
  %v579 = vadd.f32 %v423, %v578
  %v580 = vpop.f32.mrb[0].mxu0
  %581 = vmatprep.mubr.bf16.mxu0 0
  %582 = vmatmul.mubr.bf16.gmra.mrb[0].mxu0 %v519
  %v583 = vpop.f32.mrb[0].mxu0
  %v584 = vadd.f32 %v428, %v583
  %v585 = vpop.f32.mrb[0].mxu0
  %v586 = vpop.f32.mrb[0].mxu0
  %v587 = vadd.f32 %v433, %v586
  %v588 = vpop.f32.mrb[0].mxu0
  %589 = vmatprep.mubr.bf16.mxu0 0
  %590 = vmatmul.mubr.bf16.gmra.mrb[0].mxu0 %v520
  %v591 = vpop.f32.mrb[0].mxu0
  %v592 = vadd.f32 %v438, %v591
  %v593 = vpop.f32.mrb[0].mxu0
  %v594 = vpop.f32.mrb[0].mxu0
  %v595 = vadd.f32 %v443, %v594
  %v596 = vpop.f32.mrb[0].mxu0
  %597 = vmatprep.mubr.bf16.mxu0 0
  %598 = vmatmul.mubr.bf16.gmra.mrb[0].mxu0 %v521
  %v599 = vpop.f32.mrb[0].mxu0
  %v600 = vadd.f32 %v448, %v599
  %v601 = vpop.f32.mrb[0].mxu0
  %v602 = vpop.f32.mrb[0].mxu0
  %v603 = vadd.f32 %v453, %v602
  %v604 = vpop.f32.mrb[0].mxu0
  %605 = vmatprep.mubr.bf16.mxu0 0
  %606 = vmatmul.mubr.bf16.gmra.mrb[0].mxu0 %v522
  %v607 = vpop.f32.mrb[0].mxu0
  %v608 = vadd.f32 %v458, %v607
  %v609 = vpop.f32.mrb[0].mxu0
  %v610 = vpop.f32.mrb[0].mxu0
  %v611 = vadd.f32 %v463, %v610
  %v612 = vpop.f32.mrb[0].mxu0
  %613 = vmatprep.mubr.bf16.mxu0 0
  %614 = vmatmul.mubr.bf16.gmra.mrb[0].mxu0 %v523
  %v615 = vpop.f32.mrb[0].mxu0
  %v616 = vadd.f32 %v468, %v615
  %v617 = vpop.f32.mrb[0].mxu0
  %v618 = vpop.f32.mrb[0].mxu0
  %v619 = vadd.f32 %v473, %v618
  %v620 = vpop.f32.mrb[0].mxu0
  %621 = vmatprep.mubr.bf16.mxu0 0
  %622 = vmatmul.mubr.bf16.gmra.mrb[0].mxu0 %v524
  %v623 = vpop.f32.mrb[0].mxu0
  %v624 = vadd.f32 %v478, %v623
  %v625 = vpop.f32.mrb[0].mxu0
  %v626 = vpop.f32.mrb[0].mxu0
  %v627 = vadd.f32 %v483, %v626
  %v628 = vpop.f32.mrb[0].mxu0
  %629 = vdwg.mxu0
  %v630 = vmul.f32 %v568, %v568
  %v631 = vmul.f32 %v571, %v571
  %v632 = vmul.f32 %v576, %v576
  %v633 = vmul.f32 %v579, %v579
  %v634 = vmul.f32 %v584, %v584
  %v635 = vmul.f32 %v587, %v587
  %v636 = vmul.f32 %v592, %v592
  %v637 = vmul.f32 %v595, %v595
  %v638 = vmul.f32 %v600, %v600
  %v639 = vmul.f32 %v603, %v603
  %v640 = vmul.f32 %v608, %v608
  %v641 = vmul.f32 %v611, %v611
  %v642 = vmul.f32 %v616, %v616
  %v643 = vmul.f32 %v619, %v619
  %v644 = vmul.f32 %v624, %v624
  %v645 = vmul.f32 %v627, %v627
  %v646 = vmul.f32 %v568, %v630
  %v647 = vmul.f32 %v571, %v631
  %v648 = vmul.f32 %v576, %v632
  %v649 = vmul.f32 %v579, %v633
  %v650 = vmul.f32 %v584, %v634
  %v651 = vmul.f32 %v587, %v635
  %v652 = vmul.f32 %v592, %v636
  %v653 = vmul.f32 %v595, %v637
  %v654 = vmul.f32 %v600, %v638
  %v655 = vmul.f32 %v603, %v639
  %v656 = vmul.f32 %v608, %v640
  %v657 = vmul.f32 %v611, %v641
  %v658 = vmul.f32 %v616, %v642
  %v659 = vmul.f32 %v619, %v643
  %v660 = vmul.f32 %v624, %v644
  %v661 = vmul.f32 %v627, %v645
  %v662 = vmul.f32 %v646, 0.044715
  %v663 = vmul.f32 %v647, 0.044715
  %v664 = vmul.f32 %v648, 0.044715
  %v665 = vmul.f32 %v649, 0.044715
  %v666 = vmul.f32 %v650, 0.044715
  %v667 = vmul.f32 %v651, 0.044715
  %v668 = vmul.f32 %v652, 0.044715
  %v669 = vmul.f32 %v653, 0.044715
  %v670 = vmul.f32 %v654, 0.044715
  %v671 = vmul.f32 %v655, 0.044715
  %v672 = vmul.f32 %v656, 0.044715
  %v673 = vmul.f32 %v657, 0.044715
  %v674 = vmul.f32 %v658, 0.044715
  %v675 = vmul.f32 %v659, 0.044715
  %v676 = vmul.f32 %v660, 0.044715
  %v677 = vmul.f32 %v661, 0.044715
  %v678 = vadd.f32 %v568, %v662
  %v679 = vadd.f32 %v571, %v663
  %v680 = vadd.f32 %v576, %v664
  %v681 = vadd.f32 %v579, %v665
  %v682 = vadd.f32 %v584, %v666
  %v683 = vadd.f32 %v587, %v667
  %v684 = vadd.f32 %v592, %v668
  %v685 = vadd.f32 %v595, %v669
  %v686 = vadd.f32 %v600, %v670
  %v687 = vadd.f32 %v603, %v671
  %v688 = vadd.f32 %v608, %v672
  %v689 = vadd.f32 %v611, %v673
  %v690 = vadd.f32 %v616, %v674
  %v691 = vadd.f32 %v619, %v675
  %v692 = vadd.f32 %v624, %v676
  %v693 = vadd.f32 %v627, %v677
  %v694 = vmul.f32 %v678, 0.7978846
  %v695 = vmul.f32 %v679, 0.7978846
  %v696 = vmul.f32 %v680, 0.7978846
  %v697 = vmul.f32 %v681, 0.7978846
  %v698 = vmul.f32 %v682, 0.7978846
  %v699 = vmul.f32 %v683, 0.7978846
  %v700 = vmul.f32 %v684, 0.7978846
  %v701 = vmul.f32 %v685, 0.7978846
  %v702 = vmul.f32 %v686, 0.7978846
  %v703 = vmul.f32 %v687, 0.7978846
  %v704 = vmul.f32 %v688, 0.7978846
  %v705 = vmul.f32 %v689, 0.7978846
  %v706 = vmul.f32 %v690, 0.7978846
  %v707 = vmul.f32 %v691, 0.7978846
  %v708 = vmul.f32 %v692, 0.7978846
  %v709 = vmul.f32 %v693, 0.7978846
  %v710 = vtanh.pop %v694
  %v711 = vtanh.pop %v695
  %v712 = vtanh.pop %v696
  %v713 = vtanh.pop %v697
  %v714 = vtanh.pop %v698
  %v715 = vtanh.pop %v699
  %v716 = vtanh.pop %v700
  %v717 = vtanh.pop %v701
  %v718 = vtanh.pop %v702
  %v719 = vtanh.pop %v703
  %v720 = vtanh.pop %v704
  %v721 = vtanh.pop %v705
  %v722 = vtanh.pop %v706
  %v723 = vtanh.pop %v707
  %v724 = vtanh.pop %v708
  %v725 = vtanh.pop %v709
  %v726 = vadd.f32 %v710, 1.0
  %v727 = vadd.f32 %v711, 1.0
  %v728 = vadd.f32 %v712, 1.0
  %v729 = vadd.f32 %v713, 1.0
  %v730 = vadd.f32 %v714, 1.0
  %v731 = vadd.f32 %v715, 1.0
  %v732 = vadd.f32 %v716, 1.0
  %v733 = vadd.f32 %v717, 1.0
  %v734 = vadd.f32 %v718, 1.0
  %v735 = vadd.f32 %v719, 1.0
  %v736 = vadd.f32 %v720, 1.0
  %v737 = vadd.f32 %v721, 1.0
  %v738 = vadd.f32 %v722, 1.0
  %v739 = vadd.f32 %v723, 1.0
  %v740 = vadd.f32 %v724, 1.0
  %v741 = vadd.f32 %v725, 1.0
  %v742 = vmul.f32 %v726, 0.5
  %v743 = vmul.f32 %v727, 0.5
  %v744 = vmul.f32 %v728, 0.5
  %v745 = vmul.f32 %v729, 0.5
  %v746 = vmul.f32 %v730, 0.5
  %v747 = vmul.f32 %v731, 0.5
  %v748 = vmul.f32 %v732, 0.5
  %v749 = vmul.f32 %v733, 0.5
  %v750 = vmul.f32 %v734, 0.5
  %v751 = vmul.f32 %v735, 0.5
  %v752 = vmul.f32 %v736, 0.5
  %v753 = vmul.f32 %v737, 0.5
  %v754 = vmul.f32 %v738, 0.5
  %v755 = vmul.f32 %v739, 0.5
  %v756 = vmul.f32 %v740, 0.5
  %v757 = vmul.f32 %v741, 0.5
  %v758 = vmul.f32 %v568, %v742
  %v759 = vmul.f32 %v571, %v743
  %v760 = vmul.f32 %v576, %v744
  %v761 = vmul.f32 %v579, %v745
  %v762 = vmul.f32 %v584, %v746
  %v763 = vmul.f32 %v587, %v747
  %v764 = vmul.f32 %v592, %v748
  %v765 = vmul.f32 %v595, %v749
  %v766 = vmul.f32 %v600, %v750
  %v767 = vmul.f32 %v603, %v751
  %v768 = vmul.f32 %v608, %v752
  %v769 = vmul.f32 %v611, %v753
  %v770 = vmul.f32 %v616, %v754
  %v771 = vmul.f32 %v619, %v755
  %v772 = vmul.f32 %v624, %v756
  %v773 = vmul.f32 %v627, %v757
  %v774 = vld [vmem:[%s7] sm:$0xf]
  %v775 = vld [vmem:[%s7 + $0x4] sm:$0xf]
  %v776 = vld [vmem:[%s7 + $0x8] sm:$0xf]
  %v777 = vld [vmem:[%s7 + $0xc] sm:$0xf]
  %v778 = vld [vmem:[%s7 + $0x10] sm:$0xf]
  %v779 = vld [vmem:[%s7 + $0x14] sm:$0xf]
  %v780 = vld [vmem:[%s7 + $0x18] sm:$0xf]
  %v781 = vld [vmem:[%s7 + $0x1c] sm:$0xf]
  %v782 = vld [vmem:[%s7 + $0x20] sm:$0xf]
  %v783 = vld [vmem:[%s7 + $0x24] sm:$0xf]
  %v784 = vld [vmem:[%s7 + $0x28] sm:$0xf]
  %v785 = vld [vmem:[%s7 + $0x2c] sm:$0xf]
  %v786 = vld [vmem:[%s7 + $0x30] sm:$0xf]
  %v787 = vld [vmem:[%s7 + $0x34] sm:$0xf]
  %v788 = vld [vmem:[%s7 + $0x38] sm:$0xf]
  %v789 = vld [vmem:[%s7 + $0x3c] sm:$0xf]
  %v790 = vpack.c.bf16 %v759, %v758
  %v791 = vpack.c.bf16 %v761, %v760
  %v792 = vpack.c.bf16 %v763, %v762
  %v793 = vpack.c.bf16 %v765, %v764
  %v794 = vpack.c.bf16 %v767, %v766
  %v795 = vpack.c.bf16 %v769, %v768
  %v796 = vpack.c.bf16 %v771, %v770
  %v797 = vpack.c.bf16 %v773, %v772
  %v814 = vunpack.c.l.b16 %v774
  %v815 = vunpack.c.l.b16 %v775
  %v816 = vunpack.c.l.b16 %v776
  %v817 = vunpack.c.l.b16 %v777
  %v818 = vunpack.c.l.b16 %v778
  %v819 = vunpack.c.l.b16 %v779
  %v820 = vunpack.c.l.b16 %v780
  %v821 = vunpack.c.l.b16 %v781
  %v822 = vunpack.c.l.b16 %v782
  %v823 = vunpack.c.l.b16 %v783
  %v824 = vunpack.c.l.b16 %v784
  %v825 = vunpack.c.l.b16 %v785
  %v826 = vunpack.c.l.b16 %v786
  %v827 = vunpack.c.l.b16 %v787
  %v828 = vunpack.c.l.b16 %v788
  %v829 = vunpack.c.l.b16 %v789
  %v830 = vpack.c.b16 %v815, %v814
  %v831 = vpack.c.b16 %v817, %v816
  %v832 = vpack.c.b16 %v819, %v818
  %v833 = vpack.c.b16 %v821, %v820
  %v834 = vpack.c.b16 %v823, %v822
  %v835 = vpack.c.b16 %v825, %v824
  %v836 = vpack.c.b16 %v827, %v826
  %v837 = vpack.c.b16 %v829, %v828
  %846 = vmatprep.subr.bf16.mxu0 0
  %847 = vmatpush1.bf16.msra.mxu0 %v790
  %848 = vmatprep.subr.bf16.mxu0 0
  %849 = vmatpush1.bf16.msra.mxu0 %v791
  %850 = vmatprep.subr.bf16.mxu0 0
  %851 = vmatpush1.bf16.msra.mxu0 %v792
  %852 = vmatprep.subr.bf16.mxu0 0
  %853 = vmatpush1.bf16.msra.mxu0 %v793
  %854 = vmatprep.subr.bf16.mxu0 0
  %855 = vmatpush1.bf16.msra.mxu0 %v794
  %856 = vmatprep.subr.bf16.mxu0 0
  %857 = vmatpush1.bf16.msra.mxu0 %v795
  %858 = vmatprep.subr.bf16.mxu0 0
  %859 = vmatpush1.bf16.msra.mxu0 %v796
  %860 = vmatprep.subr.bf16.mxu0 0
  %861 = vmatpush1.bf16.msra.mxu0 %v797
  %862 = vmatprep.subr.bf16.mxu0 0
  %863 = vmatpush1.bf16.msra.mxu0 0
  %864 = vmatprep.subr.bf16.mxu0 0
  %865 = vmatpush1.bf16.msra.mxu0 0
  %866 = vmatprep.subr.bf16.mxu0 0
  %867 = vmatpush1.bf16.msra.mxu0 0
  %868 = vmatprep.subr.bf16.mxu0 0
  %869 = vmatpush1.bf16.msra.mxu0 0
  %870 = vmatprep.subr.bf16.mxu0 0
  %871 = vmatpush1.bf16.msra.mxu0 0
  %872 = vmatprep.subr.bf16.mxu0 0
  %873 = vmatpush1.bf16.msra.mxu0 0
  %874 = vmatprep.subr.bf16.mxu0 0
  %875 = vmatpush1.bf16.msra.mxu0 0
  %876 = vmatprep.subr.bf16.mxu0 0
  %877 = vmatpush1.bf16.msra.mxu0 0
  %878 = vmatprep.mubr.bf16.mxu0 0
  %879 = vmatmul.mubr.bf16.gmra.mrb[0].mxu0 %v830
  %v880 = vpop.f32.mrb[0].mxu0
  %v881 = vadd.f32 0.0, %v880
  %v882 = vpop.f32.mrb[0].mxu0
  %v883 = vpop.f32.mrb[0].mxu0
  %v884 = vadd.f32 0.0, %v883
  %v885 = vpop.f32.mrb[0].mxu0
  %886 = vmatprep.mubr.bf16.mxu0 0
  %887 = vmatmul.mubr.bf16.gmra.mrb[0].mxu0 %v831
  %v888 = vpop.f32.mrb[0].mxu0
  %v889 = vadd.f32 0.0, %v888
  %v890 = vpop.f32.mrb[0].mxu0
  %v891 = vpop.f32.mrb[0].mxu0
  %v892 = vadd.f32 0.0, %v891
  %v893 = vpop.f32.mrb[0].mxu0
  %894 = vmatprep.mubr.bf16.mxu0 0
  %895 = vmatmul.mubr.bf16.gmra.mrb[0].mxu0 %v832
  %v896 = vpop.f32.mrb[0].mxu0
  %v897 = vadd.f32 0.0, %v896
  %v898 = vpop.f32.mrb[0].mxu0
  %v899 = vpop.f32.mrb[0].mxu0
  %v900 = vadd.f32 0.0, %v899
  %v901 = vpop.f32.mrb[0].mxu0
  %902 = vmatprep.mubr.bf16.mxu0 0
  %903 = vmatmul.mubr.bf16.gmra.mrb[0].mxu0 %v833
  %v904 = vpop.f32.mrb[0].mxu0
  %v905 = vadd.f32 0.0, %v904
  %v906 = vpop.f32.mrb[0].mxu0
  %v907 = vpop.f32.mrb[0].mxu0
  %v908 = vadd.f32 0.0, %v907
  %v909 = vpop.f32.mrb[0].mxu0
  %910 = vmatprep.mubr.bf16.mxu0 0
  %911 = vmatmul.mubr.bf16.gmra.mrb[0].mxu0 %v834
  %v912 = vpop.f32.mrb[0].mxu0
  %v913 = vadd.f32 0.0, %v912
  %v914 = vpop.f32.mrb[0].mxu0
  %v915 = vpop.f32.mrb[0].mxu0
  %v916 = vadd.f32 0.0, %v915
  %v917 = vpop.f32.mrb[0].mxu0
  %918 = vmatprep.mubr.bf16.mxu0 0
  %919 = vmatmul.mubr.bf16.gmra.mrb[0].mxu0 %v835
  %v920 = vpop.f32.mrb[0].mxu0
  %v921 = vadd.f32 0.0, %v920
  %v922 = vpop.f32.mrb[0].mxu0
  %v923 = vpop.f32.mrb[0].mxu0
  %v924 = vadd.f32 0.0, %v923
  %v925 = vpop.f32.mrb[0].mxu0
  %926 = vmatprep.mubr.bf16.mxu0 0
  %927 = vmatmul.mubr.bf16.gmra.mrb[0].mxu0 %v836
  %v928 = vpop.f32.mrb[0].mxu0
  %v929 = vadd.f32 0.0, %v928
  %v930 = vpop.f32.mrb[0].mxu0
  %v931 = vpop.f32.mrb[0].mxu0
  %v932 = vadd.f32 0.0, %v931
  %v933 = vpop.f32.mrb[0].mxu0
  %934 = vmatprep.mubr.bf16.mxu0 0
  %935 = vmatmul.mubr.bf16.gmra.mrb[0].mxu0 %v837
  %v936 = vpop.f32.mrb[0].mxu0
  %v937 = vadd.f32 0.0, %v936
  %v938 = vpop.f32.mrb[0].mxu0
  %v939 = vpop.f32.mrb[0].mxu0
  %v940 = vadd.f32 0.0, %v939
  %v941 = vpop.f32.mrb[0].mxu0
  %942 = vdwg.mxu0
  %v943 = vadd.f32 %v303, %v881
  %v944 = vadd.f32 %v306, %v884
  %v945 = vadd.f32 %v311, %v889
  %v946 = vadd.f32 %v314, %v892
  %v947 = vadd.f32 %v319, %v897
  %v948 = vadd.f32 %v322, %v900
  %v949 = vadd.f32 %v327, %v905
  %v950 = vadd.f32 %v330, %v908
  %v951 = vadd.f32 %v335, %v913
  %v952 = vadd.f32 %v338, %v916
  %v953 = vadd.f32 %v343, %v921
  %v954 = vadd.f32 %v346, %v924
  %v955 = vadd.f32 %v351, %v929
  %v956 = vadd.f32 %v354, %v932
  %v957 = vadd.f32 %v359, %v937
  %v958 = vadd.f32 %v362, %v940
  %v959 = vld [vmem:[%s8] sm:$0xff]
  %v960 = vld [vmem:[%s8 + $0x8] sm:$0xff]
  %v961 = vld [vmem:[%s8 + $0x10] sm:$0xff]
  %v962 = vld [vmem:[%s8 + $0x18] sm:$0xff]
  %v963 = vld [vmem:[%s8 + $0x20] sm:$0xff]
  %v964 = vld [vmem:[%s8 + $0x28] sm:$0xff]
  %v965 = vld [vmem:[%s8 + $0x30] sm:$0xff]
  %v966 = vld [vmem:[%s8 + $0x38] sm:$0xff]
  %v967 = vld [vmem:[%s8 + $0x40] sm:$0xff]
  %v968 = vld [vmem:[%s8 + $0x48] sm:$0xff]
  %v969 = vld [vmem:[%s8 + $0x50] sm:$0xff]
  %v970 = vld [vmem:[%s8 + $0x58] sm:$0xff]
  %v971 = vld [vmem:[%s8 + $0x60] sm:$0xff]
  %v972 = vld [vmem:[%s8 + $0x68] sm:$0xff]
  %v973 = vld [vmem:[%s8 + $0x70] sm:$0xff]
  %v974 = vld [vmem:[%s8 + $0x78] sm:$0xff]
  %976 = vset.pattern.permute.xlu0 0
  %977 = vperm.xlu0 %976, %v959
  %v978 = vpop.permute.xlu0 %977
  %981 = vset.pattern.permute.xlu0 0
  %982 = vperm.xlu0 %981, %v960
  %v983 = vpop.permute.xlu0 %982
  %986 = vset.pattern.permute.xlu0 0
  %987 = vperm.xlu0 %986, %v961
  %v988 = vpop.permute.xlu0 %987
  %991 = vset.pattern.permute.xlu0 0
  %992 = vperm.xlu0 %991, %v962
  %v993 = vpop.permute.xlu0 %992
  %996 = vset.pattern.permute.xlu0 0
  %997 = vperm.xlu0 %996, %v963
  %v998 = vpop.permute.xlu0 %997
  %1001 = vset.pattern.permute.xlu0 0
  %1002 = vperm.xlu0 %1001, %v964
  %v1003 = vpop.permute.xlu0 %1002
  %1006 = vset.pattern.permute.xlu0 0
  %1007 = vperm.xlu0 %1006, %v965
  %v1008 = vpop.permute.xlu0 %1007
  %1011 = vset.pattern.permute.xlu0 0
  %1012 = vperm.xlu0 %1011, %v966
  %v1013 = vpop.permute.xlu0 %1012
  %1016 = vset.pattern.permute.xlu0 0
  %1017 = vperm.xlu0 %1016, %v967
  %v1018 = vpop.permute.xlu0 %1017
  %1021 = vset.pattern.permute.xlu0 0
  %1022 = vperm.xlu0 %1021, %v968
  %v1023 = vpop.permute.xlu0 %1022
  %1026 = vset.pattern.permute.xlu0 0
  %1027 = vperm.xlu0 %1026, %v969
  %v1028 = vpop.permute.xlu0 %1027
  %1031 = vset.pattern.permute.xlu0 0
  %1032 = vperm.xlu0 %1031, %v970
  %v1033 = vpop.permute.xlu0 %1032
  %1036 = vset.pattern.permute.xlu0 0
  %1037 = vperm.xlu0 %1036, %v971
  %v1038 = vpop.permute.xlu0 %1037
  %1041 = vset.pattern.permute.xlu0 0
  %1042 = vperm.xlu0 %1041, %v972
  %v1043 = vpop.permute.xlu0 %1042
  %1046 = vset.pattern.permute.xlu0 0
  %1047 = vperm.xlu0 %1046, %v973
  %v1048 = vpop.permute.xlu0 %1047
  %1051 = vset.pattern.permute.xlu0 0
  %1052 = vperm.xlu0 %1051, %v974
  %v1053 = vpop.permute.xlu0 %1052
  %v1055 = vadd.f32 %v943, %v978
  %v1056 = vadd.f32 %v944, %v983
  %v1057 = vadd.f32 %v945, %v988
  %v1058 = vadd.f32 %v946, %v993
  %v1059 = vadd.f32 %v947, %v998
  %v1060 = vadd.f32 %v948, %v1003
  %v1061 = vadd.f32 %v949, %v1008
  %v1062 = vadd.f32 %v950, %v1013
  %v1063 = vadd.f32 %v951, %v1018
  %v1064 = vadd.f32 %v952, %v1023
  %v1065 = vadd.f32 %v953, %v1028
  %v1066 = vadd.f32 %v954, %v1033
  %v1067 = vadd.f32 %v955, %v1038
  %v1068 = vadd.f32 %v956, %v1043
  %v1069 = vadd.f32 %v957, %v1048
  %v1070 = vadd.f32 %v958, %v1053
  %v1071 = vld [vmem:[%s9] sm:$0x1]
  %v1072 = vpack.c.bf16 %v1056, %v1055
  %v1073 = vpack.c.bf16 %v1058, %v1057
  %v1074 = vpack.c.bf16 %v1060, %v1059
  %v1075 = vpack.c.bf16 %v1062, %v1061
  %v1076 = vpack.c.bf16 %v1064, %v1063
  %v1077 = vpack.c.bf16 %v1066, %v1065
  %v1078 = vpack.c.bf16 %v1068, %v1067
  %v1079 = vpack.c.bf16 %v1070, %v1069
  %v1080 = vld [vmem:[#allocation2] sm:$0x1]
  %1082 = vset.pattern.permute.xlu0 0
  %1083 = vperm.xlu0 %1082, %v1080
  %v1084 = vpop.permute.xlu0 %1083
  %v1086 = vlaneseq
  %v1087 = vshrl.u32 %v1086, 7
  %v1088 = vsub.s32 0, %v1087
  %v1089 = vrot.slane %v1084, %v1088
  %1090 = vmatprep.subr.bf16.mxu0 0
  %1091 = vmatpush1.bf16.msra.mxu0 %v1072
  %1092 = vmatprep.subr.bf16.mxu0 0
  %1093 = vmatpush1.bf16.msra.mxu0 %v1073
  %1094 = vmatprep.subr.bf16.mxu0 0
  %1095 = vmatpush1.bf16.msra.mxu0 %v1074
  %1096 = vmatprep.subr.bf16.mxu0 0
  %1097 = vmatpush1.bf16.msra.mxu0 %v1075
  %1098 = vmatprep.subr.bf16.mxu0 0
  %1099 = vmatpush1.bf16.msra.mxu0 %v1076
  %1100 = vmatprep.subr.bf16.mxu0 0
  %1101 = vmatpush1.bf16.msra.mxu0 %v1077
  %1102 = vmatprep.subr.bf16.mxu0 0
  %1103 = vmatpush1.bf16.msra.mxu0 %v1078
  %1104 = vmatprep.subr.bf16.mxu0 0
  %1105 = vmatpush1.bf16.msra.mxu0 %v1079
  %1106 = vmatprep.subr.bf16.mxu0 0
  %1107 = vmatpush1.bf16.msra.mxu0 0
  %1108 = vmatprep.subr.bf16.mxu0 0
  %1109 = vmatpush1.bf16.msra.mxu0 0
  %1110 = vmatprep.subr.bf16.mxu0 0
  %1111 = vmatpush1.bf16.msra.mxu0 0
  %1112 = vmatprep.subr.bf16.mxu0 0
  %1113 = vmatpush1.bf16.msra.mxu0 0
  %1114 = vmatprep.subr.bf16.mxu0 0
  %1115 = vmatpush1.bf16.msra.mxu0 0
  %1116 = vmatprep.subr.bf16.mxu0 0
  %1117 = vmatpush1.bf16.msra.mxu0 0
  %1118 = vmatprep.subr.bf16.mxu0 0
  %1119 = vmatpush1.bf16.msra.mxu0 0
  %1120 = vmatprep.subr.bf16.mxu0 0
  %1121 = vmatpush1.bf16.msra.mxu0 0
  %1122 = vmatprep.mubr.bf16.mxu0 0
  %1123 = vmatmul.mubr.bf16.gmra.mrb[0].mxu0 %v1071
  %v1124 = vpop.f32.mrb[0].mxu0
  %v1125 = vadd.f32 %v1089, %v1124
  %v1126 = vpop.f32.mrb[0].mxu0
  %v1127 = vpop.f32.mrb[0].mxu0
  %v1128 = vpop.f32.mrb[0].mxu0
  %1129 = vdwg.mxu0
  %v1130 = vld [vmem:[%s1] sm:$0x1]
  %v1131 = vld [vmem:[%s2] sm:$0x1]
  %v1132 = vxor.u32 %v1125, 2147483648
  %v1133 = vmul.f32 %v1132, 1.442695
  %v1134 = vpow.pop %v1133
  %v1135 = vadd.f32 %v1134, 1.0
  %v1136 = vrcp.pop %v1135
  %v1137 = vmul.f32 1.0, %v1136
  %1138 = vst [vmem:[%s11] sm:$0x1] %v1125
  %1139 = vst [vmem:[%s12] sm:$0x1] %v1137
  %v1140 = vmax.f32 %v1125, 0.0
  %v1141 = vmul.f32 %v1125, %v1131
  %v1142 = vsub.f32 %v1140, %v1141
  %v1143 = vand.u32 2147483647, %v1125
  %v1144 = vsub.f32 0.0, %v1143
  %v1145 = vmul.f32 %v1144, 1.442695
  %v1146 = vpow.pop %v1145
  %v1147 = vadd.f32 %v1146, 1.0
  %v1148 = vlog2.pop %v1147
  %v1149 = vmul.f32 %v1148, 0.6931472
  %v1150 = vadd.f32 %v1142, %v1149
  %v1151 = vmul.f32 %v1137, %v1130
  %v1152 = vmul.f32 %v1131, %v1130
  %v1153 = vmul.f32 %v1150, %v1130
  %v1155 = vlaneseq
  %v1156 = vshrl.u32 %v1155, 7
  %v1157 = vsub.s32 0, %v1156
  %v1158 = vrot.slane %v1152, %v1157
  %v1161 = vlaneseq
  %v1162 = vshrl.u32 %v1161, 7
  %v1163 = vsub.s32 0, %v1162
  %v1164 = vrot.slane %v1130, %v1163
  %v1167 = vrot.slane %v1153, 5
  %vm1169 = vcmask 1040384
  %v1170 = vsel %vm1169, %v1151, %v1158
  %vm1171 = vcmask 1041408
  %v1172 = vsel %vm1171, %v1170, %v1164
  %vm1173 = vcmask 1042432
  %v1174 = vsel %vm1173, %v1172, %v1167
  %s1175 = smul.u32 0, 128
  %v1176 = vlaneseq
  %v1177 = vshrl.u32 %v1176, 7
  %v1178 = vadd.s32 %v1177, 8
  %v1179 = vadd.s32 %v1177, 16
  %v1180 = vadd.s32 %v1177, 24
  %v1181 = vadd.s32 %v1177, 32
  %v1182 = vadd.s32 %v1177, 40
  %v1183 = vadd.s32 %v1177, 48
  %v1184 = vadd.s32 %v1177, 56
  %v1185 = vadd.s32 %v1177, 64
  %v1186 = vadd.s32 %v1177, 72
  %v1187 = vadd.s32 %v1177, 80
  %v1188 = vadd.s32 %v1177, 88
  %v1189 = vadd.s32 %v1177, 96
  %v1190 = vadd.s32 %v1177, 104
  %v1191 = vadd.s32 %v1177, 112
  %v1192 = vadd.s32 %v1177, 120
  %v1193 = vstv %s1175
  %v1194 = vadd.s32 %v1193, %v1177
  %v1195 = vadd.s32 %v1193, %v1178
  %v1196 = vadd.s32 %v1193, %v1179
  %v1197 = vadd.s32 %v1193, %v1180
  %v1198 = vadd.s32 %v1193, %v1181
  %v1199 = vadd.s32 %v1193, %v1182
  %v1200 = vadd.s32 %v1193, %v1183
  %v1201 = vadd.s32 %v1193, %v1184
  %v1202 = vadd.s32 %v1193, %v1185
  %v1203 = vadd.s32 %v1193, %v1186
  %v1204 = vadd.s32 %v1193, %v1187
  %v1205 = vadd.s32 %v1193, %v1188
  %v1206 = vadd.s32 %v1193, %v1189
  %v1207 = vadd.s32 %v1193, %v1190
  %v1208 = vadd.s32 %v1193, %v1191
  %v1209 = vadd.s32 %v1193, %v1192
  %v1210 = vlaneseq
  %v1211 = vand.u32 %v1210, 127
  %v1212 = vmul.u32 %v1211, 16
  %vm1213 = vcmp.ge.s32.totalorder %v1194, %v1212
  %vm1214 = vcmp.ge.s32.totalorder %v1195, %v1212
  %vm1215 = vcmp.ge.s32.totalorder %v1196, %v1212
  %vm1216 = vcmp.ge.s32.totalorder %v1197, %v1212
  %vm1217 = vcmp.ge.s32.totalorder %v1198, %v1212
  %vm1218 = vcmp.ge.s32.totalorder %v1199, %v1212
  %vm1219 = vcmp.ge.s32.totalorder %v1200, %v1212
  %vm1220 = vcmp.ge.s32.totalorder %v1201, %v1212
  %vm1221 = vcmp.ge.s32.totalorder %v1202, %v1212
  %vm1222 = vcmp.ge.s32.totalorder %v1203, %v1212
  %vm1223 = vcmp.ge.s32.totalorder %v1204, %v1212
  %vm1224 = vcmp.ge.s32.totalorder %v1205, %v1212
  %vm1225 = vcmp.ge.s32.totalorder %v1206, %v1212
  %vm1226 = vcmp.ge.s32.totalorder %v1207, %v1212
  %vm1227 = vcmp.ge.s32.totalorder %v1208, %v1212
  %vm1228 = vcmp.ge.s32.totalorder %v1209, %v1212
  %v1229 = vadd.s32 %v1212, 16
  %vm1230 = vcmp.lt.s32.totalorder %v1194, %v1229
  %vm1231 = vcmp.lt.s32.totalorder %v1195, %v1229
  %vm1232 = vcmp.lt.s32.totalorder %v1196, %v1229
  %vm1233 = vcmp.lt.s32.totalorder %v1197, %v1229
  %vm1234 = vcmp.lt.s32.totalorder %v1198, %v1229
  %vm1235 = vcmp.lt.s32.totalorder %v1199, %v1229
  %vm1236 = vcmp.lt.s32.totalorder %v1200, %v1229
  %vm1237 = vcmp.lt.s32.totalorder %v1201, %v1229
  %vm1238 = vcmp.lt.s32.totalorder %v1202, %v1229
  %vm1239 = vcmp.lt.s32.totalorder %v1203, %v1229
  %vm1240 = vcmp.lt.s32.totalorder %v1204, %v1229
  %vm1241 = vcmp.lt.s32.totalorder %v1205, %v1229
  %vm1242 = vcmp.lt.s32.totalorder %v1206, %v1229
  %vm1243 = vcmp.lt.s32.totalorder %v1207, %v1229
  %vm1244 = vcmp.lt.s32.totalorder %v1208, %v1229
  %vm1245 = vcmp.lt.s32.totalorder %v1209, %v1229
  %vm1246 = vmand %vm1213, %vm1230
  %vm1247 = vmand %vm1214, %vm1231
  %vm1248 = vmand %vm1215, %vm1232
  %vm1249 = vmand %vm1216, %vm1233
  %vm1250 = vmand %vm1217, %vm1234
  %vm1251 = vmand %vm1218, %vm1235
  %vm1252 = vmand %vm1219, %vm1236
  %vm1253 = vmand %vm1220, %vm1237
  %vm1254 = vmand %vm1221, %vm1238
  %vm1255 = vmand %vm1222, %vm1239
  %vm1256 = vmand %vm1223, %vm1240
  %vm1257 = vmand %vm1224, %vm1241
  %vm1258 = vmand %vm1225, %vm1242
  %vm1259 = vmand %vm1226, %vm1243
  %vm1260 = vmand %vm1227, %vm1244
  %vm1261 = vmand %vm1228, %vm1245
  %v1262 = vsel %vm1246, 1, 0
  %v1263 = vsel %vm1247, 1, 0
  %v1264 = vsel %vm1248, 1, 0
  %v1265 = vsel %vm1249, 1, 0
  %v1266 = vsel %vm1250, 1, 0
  %v1267 = vsel %vm1251, 1, 0
  %v1268 = vsel %vm1252, 1, 0
  %v1269 = vsel %vm1253, 1, 0
  %v1270 = vsel %vm1254, 1, 0
  %v1271 = vsel %vm1255, 1, 0
  %v1272 = vsel %vm1256, 1, 0
  %v1273 = vsel %vm1257, 1, 0
  %v1274 = vsel %vm1258, 1, 0
  %v1275 = vsel %vm1259, 1, 0
  %v1276 = vsel %vm1260, 1, 0
  %v1277 = vsel %vm1261, 1, 0
  %v1278 = vcvt.s32.f32 %v1262
  %v1279 = vcvt.s32.f32 %v1263
  %v1280 = vcvt.s32.f32 %v1264
  %v1281 = vcvt.s32.f32 %v1265
  %v1282 = vcvt.s32.f32 %v1266
  %v1283 = vcvt.s32.f32 %v1267
  %v1284 = vcvt.s32.f32 %v1268
  %v1285 = vcvt.s32.f32 %v1269
  %v1286 = vcvt.s32.f32 %v1270
  %v1287 = vcvt.s32.f32 %v1271
  %v1288 = vcvt.s32.f32 %v1272
  %v1289 = vcvt.s32.f32 %v1273
  %v1290 = vcvt.s32.f32 %v1274
  %v1291 = vcvt.s32.f32 %v1275
  %v1292 = vcvt.s32.f32 %v1276
  %v1293 = vcvt.s32.f32 %v1277
  %v1294 = vpack.c.bf16 %v1279, %v1278
  %v1295 = vpack.c.bf16 %v1281, %v1280
  %v1296 = vpack.c.bf16 %v1283, %v1282
  %v1297 = vpack.c.bf16 %v1285, %v1284
  %v1298 = vpack.c.bf16 %v1287, %v1286
  %v1299 = vpack.c.bf16 %v1289, %v1288
  %v1300 = vpack.c.bf16 %v1291, %v1290
  %v1301 = vpack.c.bf16 %v1293, %v1292
  %v1302 = vpack.c.bf16 %v1174, %v1174
  %1303 = vmatprep.subr.bf16.mxu0 0
  %1304 = vmatpush1.bf16.msra.mxu0 %v1294
  %1305 = vmatprep.subr.bf16.mxu0 0
  %1306 = vmatpush1.bf16.msra.mxu0 %v1295
  %1307 = vmatprep.subr.bf16.mxu0 0
  %1308 = vmatpush1.bf16.msra.mxu0 %v1296
  %1309 = vmatprep.subr.bf16.mxu0 0
  %1310 = vmatpush1.bf16.msra.mxu0 %v1297
  %1311 = vmatprep.subr.bf16.mxu0 0
  %1312 = vmatpush1.bf16.msra.mxu0 %v1298
  %1313 = vmatprep.subr.bf16.mxu0 0
  %1314 = vmatpush1.bf16.msra.mxu0 %v1299
  %1315 = vmatprep.subr.bf16.mxu0 0
  %1316 = vmatpush1.bf16.msra.mxu0 %v1300
  %1317 = vmatprep.subr.bf16.mxu0 0
  %1318 = vmatpush1.bf16.msra.mxu0 %v1301
  %1319 = vmatprep.subr.bf16.mxu0 0
  %1320 = vmatpush1.bf16.msra.mxu0 0
  %1321 = vmatprep.subr.bf16.mxu0 0
  %1322 = vmatpush1.bf16.msra.mxu0 0
  %1323 = vmatprep.subr.bf16.mxu0 0
  %1324 = vmatpush1.bf16.msra.mxu0 0
  %1325 = vmatprep.subr.bf16.mxu0 0
  %1326 = vmatpush1.bf16.msra.mxu0 0
  %1327 = vmatprep.subr.bf16.mxu0 0
  %1328 = vmatpush1.bf16.msra.mxu0 0
  %1329 = vmatprep.subr.bf16.mxu0 0
  %1330 = vmatpush1.bf16.msra.mxu0 0
  %1331 = vmatprep.subr.bf16.mxu0 0
  %1332 = vmatpush1.bf16.msra.mxu0 0
  %1333 = vmatprep.subr.bf16.mxu0 0
  %1334 = vmatpush1.bf16.msra.mxu0 0
  %1335 = vmatprep.mubr.bf16.mxu0 0
  %1336 = vmatmul.mubr.bf16.gmra.mrb[0].mxu0 %v1302
  %v1337 = vpop.f32.mrb[0].mxu0
  %v1338 = vadd.f32 0.0, %v1337
  %v1339 = vpop.f32.mrb[0].mxu0
  %v1340 = vpop.f32.mrb[0].mxu0
  %v1341 = vpop.f32.mrb[0].mxu0
  %1342 = vdwg.mxu0
  %1343 = vst [vmem:[%s13] sm:$0xf] %v1338
  // Predicated region
  $region46: #{medsam_cancer_detector_v2_forward.1} parent=0 // pred_check
    _
  $region47: #{medsam_cancer_detector_v2_forward.1} parent=0 // pred_check_branch
    %1345 = sbr.rel (0) target = $region49
  $region48: #{medsam_cancer_detector_v2_forward.1} parent=0 // pred_region
    _
  $region49: #{medsam_cancer_detector_v2_forward.1} parent=0 // pred_fallthru
    _
  // Predicated region
  $region50: #{medsam_cancer_detector_v2_forward.1} parent=0 // pred_check
    _
  $region51: #{medsam_cancer_detector_v2_forward.1} parent=0 // pred_check_branch
    %1347 = sbr.rel (0) target = $region53
  $region52: #{medsam_cancer_detector_v2_forward.1} parent=0 // pred_region
    _
  $region53: #{medsam_cancer_detector_v2_forward.1} parent=0 // pred_fallthru
    _
  // Predicated region
  $region54: #{medsam_cancer_detector_v2_forward.1} parent=0 // pred_check
    _
  $region55: #{medsam_cancer_detector_v2_forward.1} parent=0 // pred_check_branch
    %1349 = sbr.rel (0) target = $region57
  $region56: #{medsam_cancer_detector_v2_forward.1} parent=0 // pred_region
    _
  $region57: #{medsam_cancer_detector_v2_forward.1} parent=0 // pred_fallthru
    _
  // Predicated region
  $region58: #{medsam_cancer_detector_v2_forward.1} parent=0 // pred_check
    _
  $region59: #{medsam_cancer_detector_v2_forward.1} parent=0 // pred_check_branch
    %1351 = sbr.rel (0) target = $region61
  $region60: #{medsam_cancer_detector_v2_forward.1} parent=0 // pred_region
    _
  $region61: #{medsam_cancer_detector_v2_forward.1} parent=0 // pred_fallthru
    _
  // Predicated region
  $region62: #{medsam_cancer_detector_v2_forward.1} parent=0 // pred_check
    _
  $region63: #{medsam_cancer_detector_v2_forward.1} parent=0 // pred_check_branch
    %1353 = sbr.rel (0) target = $region65
  $region64: #{medsam_cancer_detector_v2_forward.1} parent=0 // pred_region
    _
  $region65: #{medsam_cancer_detector_v2_forward.1} parent=0 // pred_fallthru
    _
  // Predicated region
  $region66: #{medsam_cancer_detector_v2_forward.1} parent=0 // pred_check
    _
  $region67: #{medsam_cancer_detector_v2_forward.1} parent=0 // pred_check_branch
    %1355 = sbr.rel (0) target = $region69
  $region68: #{medsam_cancer_detector_v2_forward.1} parent=0 // pred_region
    _
  $region69: #{medsam_cancer_detector_v2_forward.1} parent=0 // pred_fallthru
    _

</llo_original>
